<compile_context>
chip_gen: v6e
topology: v6e:2x2x1
jax: 0.10.0
libtpu: 0.0.40
codegen_flags: <defaults>
</compile_context>

<pallas_src>
import jax
import jax.numpy as jnp
from jax import lax
from jax.experimental import pallas as pl
from jax.experimental.pallas import tpu as pltpu


def bilstm_tagger_kernel(
    x_ref,        # (S*B, E)   f32 embeddings, time-major rows (t*B + b)
    wih_cat_ref,  # (E, 8H)    [wih_f | wih_b] input->gates, pre-transposed
    whh_f_ref,    # (H, 4H)    forward  hidden->gates, pre-transposed
    whh_b_ref,    # (H, 4H)    backward hidden->gates, pre-transposed
    b_cat_ref,    # (1, 8H)    [b_ih_f+b_hh_f | b_ih_b+b_hh_b]
    h0_ref,       # (2, B, H)  initial hidden state (dir 0 = fwd, dir 1 = bwd)
    c0_ref,       # (2, B, H)  initial cell state
    wout_ref,     # (H, T)     hidden2tag weight, pre-transposed
    bout_ref,     # (1, T)     hidden2tag bias
    out_ref,      # (S*B, T)   output log-probabilities, time-major rows
    xg_ref,       # scratch (S*B, 8H): precomputed x @ [wih_f|wih_b] + bias
    hf_ref,       # scratch (S*B, H): forward hidden states
    hb_ref,       # scratch (S*B, H): backward hidden states
):
    SB, E = x_ref.shape
    H = whh_f_ref.shape[0]
    G4 = 4 * H
    B = h0_ref.shape[1]
    S = SB // B

    # ---- Phase 1: hoisted input projection (+bias), both dirs, one matmul ----
    xg_ref[...] = (
        jnp.dot(x_ref[...], wih_cat_ref[...], preferred_element_type=jnp.float32)
        + b_cat_ref[...]
    )

    whh_f = whh_f_ref[...]
    whh_b = whh_b_ref[...]

    # ---- Phase 2: fused fwd + bwd recurrence, fully unrolled (S static) ----
    h_f = h0_ref[0]                                        # (B, H)
    h_b = h0_ref[1]                                        # (B, H)
    c_all = jnp.concatenate([c0_ref[0], c0_ref[1]], axis=0)  # (2B, H)

    for t in range(S):
        tb = S - 1 - t
        # Precomputed input-gate contributions (static, 128-lane-aligned slices).
        xg_f = xg_ref[t * B:(t + 1) * B, :G4]              # (B, 4H)
        xg_b = xg_ref[tb * B:(tb + 1) * B, G4:]            # (B, 4H)
        # Two small independent recurrent matmuls (scheduler can interleave).
        hg_f = jnp.dot(h_f, whh_f, preferred_element_type=jnp.float32)
        hg_b = jnp.dot(h_b, whh_b, preferred_element_type=jnp.float32)
        # Stack directions along sublanes; gate math done once on both.
        gates = jnp.concatenate([xg_f + hg_f, xg_b + hg_b], axis=0)  # (2B, 4H)
        # PyTorch gate order: i, f, g, o. (Sub-128-lane slices: H=32 toy size.)
        i = jax.nn.sigmoid(gates[:, 0 * H:1 * H])
        f = jax.nn.sigmoid(gates[:, 1 * H:2 * H])
        g = jnp.tanh(gates[:, 2 * H:3 * H])
        o = jax.nn.sigmoid(gates[:, 3 * H:4 * H])
        c_all = f * c_all + i * g                          # (2B, H)
        h_all = o * jnp.tanh(c_all)                        # (2B, H)
        h_f = h_all[:B]
        h_b = h_all[B:]
        hf_ref[t * B:(t + 1) * B, :] = h_f
        hb_ref[tb * B:(tb + 1) * B, :] = h_b

    # ---- Phase 3: batched mean + projection + log_softmax, single store ----
    h_mean = (hf_ref[...] + hb_ref[...]) * 0.5             # (S*B, H)
    logits = (
        jnp.dot(h_mean, wout_ref[...], preferred_element_type=jnp.float32)
        + bout_ref[...]
    )                                                      # (S*B, T)
    m = jnp.max(logits, axis=-1, keepdims=True)
    z = logits - m
    lse = jnp.log(jnp.sum(jnp.exp(z), axis=-1, keepdims=True))
    out_ref[...] = z - lse


def lstm_model_forward(sentences, params, h0, c0):
    """sentences: (B, S) int32 token ids. Returns (B, S, tag_size) log-probs."""
    emb = params["embed"][sentences].astype(jnp.float32)   # (B, S, E) gather (glue)
    B, S = sentences.shape
    E = emb.shape[-1]
    H = params["whh_f"].shape[0]
    T = params["wout"].shape[1]

    # Time-major, flattened rows (t*B + b) so the kernel only sees 2-D matmuls.
    x = jnp.transpose(emb, (1, 0, 2)).reshape(S * B, E)

    # Concatenate the two directions' input weights / biases along the gate axis
    # so the hoisted input projection is a single matmul.
    wih_cat = jnp.concatenate([params["wih_f"], params["wih_b"]], axis=1)  # (E, 8H)
    b_cat = jnp.concatenate([params["b_f"], params["b_b"]], axis=1)        # (1, 8H)

    kernel = pl.pallas_call(
        bilstm_tagger_kernel,
        out_shape=jax.ShapeDtypeStruct((S * B, T), jnp.float32),
        in_specs=[pl.BlockSpec(memory_space=pltpu.MemorySpace.VMEM)] * 9,
        out_specs=pl.BlockSpec(memory_space=pltpu.MemorySpace.VMEM),
        scratch_shapes=[
            pltpu.VMEM((S * B, 8 * H), jnp.float32),  # xg
            pltpu.VMEM((S * B, H), jnp.float32),      # hf
            pltpu.VMEM((S * B, H), jnp.float32),      # hb
        ],
        compiler_params=pltpu.CompilerParams(),
    )
    out_flat = kernel(
        x,
        wih_cat,
        params["whh_f"], params["whh_b"],
        b_cat,
        h0, c0,
        params["wout"], params["bout"],
    )
    return jnp.transpose(out_flat.reshape(S, B, T), (1, 0, 2))   # (B, S, T)


def reference_forward(sentences, params, h0, c0):
    """Pure-JAX reference of the same math (for correctness check)."""
    emb = params["embed"][sentences].astype(jnp.float32)   # (B, S, E)
    H = h0.shape[-1]
    xs = jnp.transpose(emb, (1, 0, 2))                     # (S, B, E)

    def cell(x_t, h, c, wih, whh, b):
        g_ = x_t @ wih + h @ whh + b
        i = jax.nn.sigmoid(g_[:, :H])
        f = jax.nn.sigmoid(g_[:, H:2 * H])
        g = jnp.tanh(g_[:, 2 * H:3 * H])
        o = jax.nn.sigmoid(g_[:, 3 * H:])
        c_new = f * c + i * g
        return o * jnp.tanh(c_new), c_new

    def fwd_step(carry, x_t):
        h, c = cell(x_t, *carry, params["wih_f"], params["whh_f"], params["b_f"])
        return (h, c), h

    def bwd_step(carry, x_t):
        h, c = cell(x_t, *carry, params["wih_b"], params["whh_b"], params["b_b"])
        return (h, c), h

    _, hf = lax.scan(fwd_step, (h0[0], c0[0]), xs)
    _, hb = lax.scan(bwd_step, (h0[1], c0[1]), xs[::-1])
    hb = hb[::-1]
    h_mean = 0.5 * (hf + hb)                               # (S, B, H)
    logits = jnp.einsum("sbh,ht->sbt", h_mean, params["wout"]) + params["bout"]
    out = jax.nn.log_softmax(logits, axis=-1)
    return jnp.transpose(out, (1, 0, 2))


def make_params(key, vocab_size, embed_dim, hidden_dim, tag_size):
    """Deterministic synthetic parameters (shapes follow the PyTorch module)."""
    ks = jax.random.split(key, 12)
    H, E, T = hidden_dim, embed_dim, tag_size
    s = 1.0 / jnp.sqrt(jnp.float32(H))

    def u(k, shape):
        return jax.random.uniform(k, shape, jnp.float32, -s, s)

    # PyTorch shapes: weight_ih (4H, E), weight_hh (4H, H); pre-transposed here.
    return {
        "embed": jax.random.normal(ks[0], (vocab_size, E), jnp.float32),
        "wih_f": u(ks[1], (4 * H, E)).T,                   # (E, 4H)
        "whh_f": u(ks[2], (4 * H, H)).T,                   # (H, 4H)
        "b_f": (u(ks[3], (4 * H,)) + u(ks[4], (4 * H,)))[None, :],    # (1, 4H)
        "wih_b": u(ks[5], (4 * H, E)).T,
        "whh_b": u(ks[6], (4 * H, H)).T,
        "b_b": (u(ks[7], (4 * H,)) + u(ks[8], (4 * H,)))[None, :],
        "wout": u(ks[9], (T, H)).T,                        # (H, T)
        "bout": u(ks[10], (T,))[None, :],                  # (1, T)
    }


if __name__ == "__main__":
    vocab_size, embed_dim, hidden_dim, tag_size = 100, 32, 32, 8
    batch, seq_len = 2, 8

    root = jax.random.PRNGKey(0)
    k_par, k_tok, k_h0, k_c0 = jax.random.split(root, 4)

    params = make_params(k_par, vocab_size, embed_dim, hidden_dim, tag_size)
    sentences = jax.random.randint(k_tok, (batch, seq_len), 0, vocab_size, jnp.int32)
    # The PyTorch forward draws random initial states; done deterministically here.
    h0 = jax.random.normal(k_h0, (2, batch, hidden_dim), jnp.float32)
    c0 = jax.random.normal(k_c0, (2, batch, hidden_dim), jnp.float32)

    out = lstm_model_forward(sentences, params, h0, c0)
    out = jax.block_until_ready(out)

    ref = reference_forward(sentences, params, h0, c0)
    assert out.shape == (batch, seq_len, tag_size)
    assert jnp.allclose(out, ref, atol=3e-5, rtol=1e-4), "mismatch vs JAX reference"

    print("KERNEL_OK")
</pallas_src>

<mosaic_0001>
module attributes {stable_mosaic.version = 11 : i64} {
  func.func @bilstm_tagger_kernel(%arg0: memref<16x32xf32, #tpu.memory_space<vmem>>, %arg1: memref<32x256xf32, #tpu.memory_space<vmem>>, %arg2: memref<32x128xf32, #tpu.memory_space<vmem>>, %arg3: memref<32x128xf32, #tpu.memory_space<vmem>>, %arg4: memref<1x256xf32, #tpu.memory_space<vmem>>, %arg5: memref<2x2x32xf32, #tpu.memory_space<vmem>>, %arg6: memref<2x2x32xf32, #tpu.memory_space<vmem>>, %arg7: memref<32x8xf32, #tpu.memory_space<vmem>>, %arg8: memref<1x8xf32, #tpu.memory_space<vmem>>, %arg9: memref<16x8xf32, #tpu.memory_space<vmem>>, %arg10: memref<16x256xf32, #tpu.memory_space<vmem>>, %arg11: memref<16x32xf32, #tpu.memory_space<vmem>>, %arg12: memref<16x32xf32, #tpu.memory_space<vmem>>) attributes {dimension_semantics = [], scalar_prefetch = 0 : i64, scratch_operands = 3 : i64, tpu.core_type = #tpu.core_type<tc>} {
    %c0 = arith.constant 0 : index
    %c0_0 = arith.constant 0 : index
    %0 = vector.load %arg0[%c0, %c0_0] : memref<16x32xf32, #tpu.memory_space<vmem>>, vector<16x32xf32>
    %c0_1 = arith.constant 0 : index
    %c0_2 = arith.constant 0 : index
    %1 = vector.load %arg1[%c0_1, %c0_2] : memref<32x256xf32, #tpu.memory_space<vmem>>, vector<32x256xf32>
    %cst = arith.constant dense<0.000000e+00> : vector<16x256xf32>
    %2 = tpu.matmul %0, %1, %cst {dimension_numbers = #tpu.dot_dimension_numbers<[1], [0], [0], [1], [0, 0, 1, 1], [], []>} : vector<16x32xf32>, vector<32x256xf32>, vector<16x256xf32> -> vector<16x256xf32>
    %c0_3 = arith.constant 0 : index
    %c0_4 = arith.constant 0 : index
    %3 = vector.load %arg4[%c0_3, %c0_4] : memref<1x256xf32, #tpu.memory_space<vmem>>, vector<1x256xf32>
    %4 = vector.broadcast %3 : vector<1x256xf32> to vector<16x256xf32>
    %5 = arith.addf %2, %4 : vector<16x256xf32>
    %c0_5 = arith.constant 0 : index
    %c0_6 = arith.constant 0 : index
    %6 = vector.load %arg10[%c0_5, %c0_6] : memref<16x256xf32, #tpu.memory_space<vmem>>, vector<16x256xf32>
    tpu.vector_store %arg10[%c0_5, %c0_6], %5 {strides = array<i32>} : memref<16x256xf32, #tpu.memory_space<vmem>>, vector<16x256xf32>,
    %c0_7 = arith.constant 0 : index
    %c0_8 = arith.constant 0 : index
    %7 = vector.load %arg2[%c0_7, %c0_8] : memref<32x128xf32, #tpu.memory_space<vmem>>, vector<32x128xf32>
    %c0_9 = arith.constant 0 : index
    %c0_10 = arith.constant 0 : index
    %8 = vector.load %arg3[%c0_9, %c0_10] : memref<32x128xf32, #tpu.memory_space<vmem>>, vector<32x128xf32>
    %c0_11 = arith.constant 0 : index
    %c0_12 = arith.constant 0 : index
    %c0_13 = arith.constant 0 : index
    %9 = vector.load %arg5[%c0_11, %c0_12, %c0_13] : memref<2x2x32xf32, #tpu.memory_space<vmem>>, vector<1x2x32xf32>
    %10 = vector.shape_cast %9 : vector<1x2x32xf32> to vector<2x32xf32>
    %c1 = arith.constant 1 : index
    %c0_14 = arith.constant 0 : index
    %c0_15 = arith.constant 0 : index
    %11 = vector.load %arg5[%c1, %c0_14, %c0_15] : memref<2x2x32xf32, #tpu.memory_space<vmem>>, vector<1x2x32xf32>
    %12 = vector.shape_cast %11 : vector<1x2x32xf32> to vector<2x32xf32>
    %c0_16 = arith.constant 0 : index
    %c0_17 = arith.constant 0 : index
    %c0_18 = arith.constant 0 : index
    %13 = vector.load %arg6[%c0_16, %c0_17, %c0_18] : memref<2x2x32xf32, #tpu.memory_space<vmem>>, vector<1x2x32xf32>
    %14 = vector.shape_cast %13 : vector<1x2x32xf32> to vector<2x32xf32>
    %c1_19 = arith.constant 1 : index
    %c0_20 = arith.constant 0 : index
    %c0_21 = arith.constant 0 : index
    %15 = vector.load %arg6[%c1_19, %c0_20, %c0_21] : memref<2x2x32xf32, #tpu.memory_space<vmem>>, vector<1x2x32xf32>
    %16 = vector.shape_cast %15 : vector<1x2x32xf32> to vector<2x32xf32>
    %17 = tpu.concatenate %14, %16 in 0 : vector<2x32xf32>, vector<2x32xf32> -> vector<4x32xf32>
    %c0_22 = arith.constant 0 : index
    %c0_23 = arith.constant 0 : index
    %18 = vector.load %arg10[%c0_22, %c0_23] : memref<16x256xf32, #tpu.memory_space<vmem>>, vector<2x128xf32>
    %c14 = arith.constant 14 : index
    %c128 = arith.constant 128 : index
    %19 = vector.load %arg10[%c14, %c128] : memref<16x256xf32, #tpu.memory_space<vmem>>, vector<2x128xf32>
    %cst_24 = arith.constant dense<0.000000e+00> : vector<2x128xf32>
    %20 = tpu.matmul %10, %7, %cst_24 {dimension_numbers = #tpu.dot_dimension_numbers<[1], [0], [0], [1], [0, 0, 1, 1], [], []>} : vector<2x32xf32>, vector<32x128xf32>, vector<2x128xf32> -> vector<2x128xf32>
    %cst_25 = arith.constant dense<0.000000e+00> : vector<2x128xf32>
    %21 = tpu.matmul %12, %8, %cst_25 {dimension_numbers = #tpu.dot_dimension_numbers<[1], [0], [0], [1], [0, 0, 1, 1], [], []>} : vector<2x32xf32>, vector<32x128xf32>, vector<2x128xf32> -> vector<2x128xf32>
    %22 = arith.addf %18, %20 : vector<2x128xf32>
    %23 = arith.addf %19, %21 : vector<2x128xf32>
    %24 = tpu.concatenate %22, %23 in 0 : vector<2x128xf32>, vector<2x128xf32> -> vector<4x128xf32>
    %25 = vector.extract_strided_slice %24 {offsets = [0, 0], sizes = [4, 32], strides = [1, 1]} : vector<4x128xf32> to vector<4x32xf32>
    %26 = arith.negf %25 : vector<4x32xf32>
    %27 = math.exp %26 : vector<4x32xf32>
    %cst_26 = arith.constant 1.000000e+00 : f32
    %28 = vector.broadcast %cst_26 : f32 to vector<4x32xf32>
    %29 = arith.addf %28, %27 : vector<4x32xf32>
    %30 = arith.divf %28, %29 : vector<4x32xf32>
    %31 = vector.extract_strided_slice %24 {offsets = [0, 32], sizes = [4, 32], strides = [1, 1]} : vector<4x128xf32> to vector<4x32xf32>
    %32 = arith.negf %31 : vector<4x32xf32>
    %33 = math.exp %32 : vector<4x32xf32>
    %cst_27 = arith.constant 1.000000e+00 : f32
    %34 = vector.broadcast %cst_27 : f32 to vector<4x32xf32>
    %35 = arith.addf %34, %33 : vector<4x32xf32>
    %36 = arith.divf %34, %35 : vector<4x32xf32>
    %37 = vector.extract_strided_slice %24 {offsets = [0, 64], sizes = [4, 32], strides = [1, 1]} : vector<4x128xf32> to vector<4x32xf32>
    %38 = math.tanh %37 : vector<4x32xf32>
    %39 = vector.extract_strided_slice %24 {offsets = [0, 96], sizes = [4, 32], strides = [1, 1]} : vector<4x128xf32> to vector<4x32xf32>
    %40 = arith.negf %39 : vector<4x32xf32>
    %41 = math.exp %40 : vector<4x32xf32>
    %cst_28 = arith.constant 1.000000e+00 : f32
    %42 = vector.broadcast %cst_28 : f32 to vector<4x32xf32>
    %43 = arith.addf %42, %41 : vector<4x32xf32>
    %44 = arith.divf %42, %43 : vector<4x32xf32>
    %45 = arith.mulf %36, %17 : vector<4x32xf32>
    %46 = arith.mulf %30, %38 : vector<4x32xf32>
    %47 = arith.addf %45, %46 : vector<4x32xf32>
    %48 = math.tanh %47 : vector<4x32xf32>
    %49 = arith.mulf %44, %48 : vector<4x32xf32>
    %50 = vector.extract_strided_slice %49 {offsets = [0, 0], sizes = [2, 32], strides = [1, 1]} : vector<4x32xf32> to vector<2x32xf32>
    %51 = vector.extract_strided_slice %49 {offsets = [2, 0], sizes = [2, 32], strides = [1, 1]} : vector<4x32xf32> to vector<2x32xf32>
    %c0_29 = arith.constant 0 : index
    %c0_30 = arith.constant 0 : index
    %52 = vector.load %arg11[%c0_29, %c0_30] : memref<16x32xf32, #tpu.memory_space<vmem>>, vector<2x32xf32>
    tpu.vector_store %arg11[%c0_29, %c0_30], %50 {strides = array<i32>} : memref<16x32xf32, #tpu.memory_space<vmem>>, vector<2x32xf32>,
    %c14_31 = arith.constant 14 : index
    %c0_32 = arith.constant 0 : index
    %53 = vector.load %arg12[%c14_31, %c0_32] : memref<16x32xf32, #tpu.memory_space<vmem>>, vector<2x32xf32>
    tpu.vector_store %arg12[%c14_31, %c0_32], %51 {strides = array<i32>} : memref<16x32xf32, #tpu.memory_space<vmem>>, vector<2x32xf32>,
    %c2 = arith.constant 2 : index
    %c0_33 = arith.constant 0 : index
    %54 = vector.load %arg10[%c2, %c0_33] : memref<16x256xf32, #tpu.memory_space<vmem>>, vector<2x128xf32>
    %c12 = arith.constant 12 : index
    %c128_34 = arith.constant 128 : index
    %55 = vector.load %arg10[%c12, %c128_34] : memref<16x256xf32, #tpu.memory_space<vmem>>, vector<2x128xf32>
    %cst_35 = arith.constant dense<0.000000e+00> : vector<2x128xf32>
    %56 = tpu.matmul %50, %7, %cst_35 {dimension_numbers = #tpu.dot_dimension_numbers<[1], [0], [0], [1], [0, 0, 1, 1], [], []>} : vector<2x32xf32>, vector<32x128xf32>, vector<2x128xf32> -> vector<2x128xf32>
    %cst_36 = arith.constant dense<0.000000e+00> : vector<2x128xf32>
    %57 = tpu.matmul %51, %8, %cst_36 {dimension_numbers = #tpu.dot_dimension_numbers<[1], [0], [0], [1], [0, 0, 1, 1], [], []>} : vector<2x32xf32>, vector<32x128xf32>, vector<2x128xf32> -> vector<2x128xf32>
    %58 = arith.addf %54, %56 : vector<2x128xf32>
    %59 = arith.addf %55, %57 : vector<2x128xf32>
    %60 = tpu.concatenate %58, %59 in 0 : vector<2x128xf32>, vector<2x128xf32> -> vector<4x128xf32>
    %61 = vector.extract_strided_slice %60 {offsets = [0, 0], sizes = [4, 32], strides = [1, 1]} : vector<4x128xf32> to vector<4x32xf32>
    %62 = arith.negf %61 : vector<4x32xf32>
    %63 = math.exp %62 : vector<4x32xf32>
    %cst_37 = arith.constant 1.000000e+00 : f32
    %64 = vector.broadcast %cst_37 : f32 to vector<4x32xf32>
    %65 = arith.addf %64, %63 : vector<4x32xf32>
    %66 = arith.divf %64, %65 : vector<4x32xf32>
    %67 = vector.extract_strided_slice %60 {offsets = [0, 32], sizes = [4, 32], strides = [1, 1]} : vector<4x128xf32> to vector<4x32xf32>
    %68 = arith.negf %67 : vector<4x32xf32>
    %69 = math.exp %68 : vector<4x32xf32>
    %cst_38 = arith.constant 1.000000e+00 : f32
    %70 = vector.broadcast %cst_38 : f32 to vector<4x32xf32>
    %71 = arith.addf %70, %69 : vector<4x32xf32>
    %72 = arith.divf %70, %71 : vector<4x32xf32>
    %73 = vector.extract_strided_slice %60 {offsets = [0, 64], sizes = [4, 32], strides = [1, 1]} : vector<4x128xf32> to vector<4x32xf32>
    %74 = math.tanh %73 : vector<4x32xf32>
    %75 = vector.extract_strided_slice %60 {offsets = [0, 96], sizes = [4, 32], strides = [1, 1]} : vector<4x128xf32> to vector<4x32xf32>
    %76 = arith.negf %75 : vector<4x32xf32>
    %77 = math.exp %76 : vector<4x32xf32>
    %cst_39 = arith.constant 1.000000e+00 : f32
    %78 = vector.broadcast %cst_39 : f32 to vector<4x32xf32>
    %79 = arith.addf %78, %77 : vector<4x32xf32>
    %80 = arith.divf %78, %79 : vector<4x32xf32>
    %81 = arith.mulf %72, %47 : vector<4x32xf32>
    %82 = arith.mulf %66, %74 : vector<4x32xf32>
    %83 = arith.addf %81, %82 : vector<4x32xf32>
    %84 = math.tanh %83 : vector<4x32xf32>
    %85 = arith.mulf %80, %84 : vector<4x32xf32>
    %86 = vector.extract_strided_slice %85 {offsets = [0, 0], sizes = [2, 32], strides = [1, 1]} : vector<4x32xf32> to vector<2x32xf32>
    %87 = vector.extract_strided_slice %85 {offsets = [2, 0], sizes = [2, 32], strides = [1, 1]} : vector<4x32xf32> to vector<2x32xf32>
    %c2_40 = arith.constant 2 : index
    %c0_41 = arith.constant 0 : index
    %88 = vector.load %arg11[%c2_40, %c0_41] : memref<16x32xf32, #tpu.memory_space<vmem>>, vector<2x32xf32>
    tpu.vector_store %arg11[%c2_40, %c0_41], %86 {strides = array<i32>} : memref<16x32xf32, #tpu.memory_space<vmem>>, vector<2x32xf32>,
    %c12_42 = arith.constant 12 : index
    %c0_43 = arith.constant 0 : index
    %89 = vector.load %arg12[%c12_42, %c0_43] : memref<16x32xf32, #tpu.memory_space<vmem>>, vector<2x32xf32>
    tpu.vector_store %arg12[%c12_42, %c0_43], %87 {strides = array<i32>} : memref<16x32xf32, #tpu.memory_space<vmem>>, vector<2x32xf32>,
    %c4 = arith.constant 4 : index
    %c0_44 = arith.constant 0 : index
    %90 = vector.load %arg10[%c4, %c0_44] : memref<16x256xf32, #tpu.memory_space<vmem>>, vector<2x128xf32>
    %c10 = arith.constant 10 : index
    %c128_45 = arith.constant 128 : index
    %91 = vector.load %arg10[%c10, %c128_45] : memref<16x256xf32, #tpu.memory_space<vmem>>, vector<2x128xf32>
    %cst_46 = arith.constant dense<0.000000e+00> : vector<2x128xf32>
    %92 = tpu.matmul %86, %7, %cst_46 {dimension_numbers = #tpu.dot_dimension_numbers<[1], [0], [0], [1], [0, 0, 1, 1], [], []>} : vector<2x32xf32>, vector<32x128xf32>, vector<2x128xf32> -> vector<2x128xf32>
    %cst_47 = arith.constant dense<0.000000e+00> : vector<2x128xf32>
    %93 = tpu.matmul %87, %8, %cst_47 {dimension_numbers = #tpu.dot_dimension_numbers<[1], [0], [0], [1], [0, 0, 1, 1], [], []>} : vector<2x32xf32>, vector<32x128xf32>, vector<2x128xf32> -> vector<2x128xf32>
    %94 = arith.addf %90, %92 : vector<2x128xf32>
    %95 = arith.addf %91, %93 : vector<2x128xf32>
    %96 = tpu.concatenate %94, %95 in 0 : vector<2x128xf32>, vector<2x128xf32> -> vector<4x128xf32>
    %97 = vector.extract_strided_slice %96 {offsets = [0, 0], sizes = [4, 32], strides = [1, 1]} : vector<4x128xf32> to vector<4x32xf32>
    %98 = arith.negf %97 : vector<4x32xf32>
    %99 = math.exp %98 : vector<4x32xf32>
    %cst_48 = arith.constant 1.000000e+00 : f32
    %100 = vector.broadcast %cst_48 : f32 to vector<4x32xf32>
    %101 = arith.addf %100, %99 : vector<4x32xf32>
    %102 = arith.divf %100, %101 : vector<4x32xf32>
    %103 = vector.extract_strided_slice %96 {offsets = [0, 32], sizes = [4, 32], strides = [1, 1]} : vector<4x128xf32> to vector<4x32xf32>
    %104 = arith.negf %103 : vector<4x32xf32>
    %105 = math.exp %104 : vector<4x32xf32>
    %cst_49 = arith.constant 1.000000e+00 : f32
    %106 = vector.broadcast %cst_49 : f32 to vector<4x32xf32>
    %107 = arith.addf %106, %105 : vector<4x32xf32>
    %108 = arith.divf %106, %107 : vector<4x32xf32>
    %109 = vector.extract_strided_slice %96 {offsets = [0, 64], sizes = [4, 32], strides = [1, 1]} : vector<4x128xf32> to vector<4x32xf32>
    %110 = math.tanh %109 : vector<4x32xf32>
    %111 = vector.extract_strided_slice %96 {offsets = [0, 96], sizes = [4, 32], strides = [1, 1]} : vector<4x128xf32> to vector<4x32xf32>
    %112 = arith.negf %111 : vector<4x32xf32>
    %113 = math.exp %112 : vector<4x32xf32>
    %cst_50 = arith.constant 1.000000e+00 : f32
    %114 = vector.broadcast %cst_50 : f32 to vector<4x32xf32>
    %115 = arith.addf %114, %113 : vector<4x32xf32>
    %116 = arith.divf %114, %115 : vector<4x32xf32>
    %117 = arith.mulf %108, %83 : vector<4x32xf32>
    %118 = arith.mulf %102, %110 : vector<4x32xf32>
    %119 = arith.addf %117, %118 : vector<4x32xf32>
    %120 = math.tanh %119 : vector<4x32xf32>
    %121 = arith.mulf %116, %120 : vector<4x32xf32>
    %122 = vector.extract_strided_slice %121 {offsets = [0, 0], sizes = [2, 32], strides = [1, 1]} : vector<4x32xf32> to vector<2x32xf32>
    %123 = vector.extract_strided_slice %121 {offsets = [2, 0], sizes = [2, 32], strides = [1, 1]} : vector<4x32xf32> to vector<2x32xf32>
    %c4_51 = arith.constant 4 : index
    %c0_52 = arith.constant 0 : index
    %124 = vector.load %arg11[%c4_51, %c0_52] : memref<16x32xf32, #tpu.memory_space<vmem>>, vector<2x32xf32>
    tpu.vector_store %arg11[%c4_51, %c0_52], %122 {strides = array<i32>} : memref<16x32xf32, #tpu.memory_space<vmem>>, vector<2x32xf32>,
    %c10_53 = arith.constant 10 : index
    %c0_54 = arith.constant 0 : index
    %125 = vector.load %arg12[%c10_53, %c0_54] : memref<16x32xf32, #tpu.memory_space<vmem>>, vector<2x32xf32>
    tpu.vector_store %arg12[%c10_53, %c0_54], %123 {strides = array<i32>} : memref<16x32xf32, #tpu.memory_space<vmem>>, vector<2x32xf32>,
    %c6 = arith.constant 6 : index
    %c0_55 = arith.constant 0 : index
    %126 = vector.load %arg10[%c6, %c0_55] : memref<16x256xf32, #tpu.memory_space<vmem>>, vector<2x128xf32>
    %c8 = arith.constant 8 : index
    %c128_56 = arith.constant 128 : index
    %127 = vector.load %arg10[%c8, %c128_56] : memref<16x256xf32, #tpu.memory_space<vmem>>, vector<2x128xf32>
    %cst_57 = arith.constant dense<0.000000e+00> : vector<2x128xf32>
    %128 = tpu.matmul %122, %7, %cst_57 {dimension_numbers = #tpu.dot_dimension_numbers<[1], [0], [0], [1], [0, 0, 1, 1], [], []>} : vector<2x32xf32>, vector<32x128xf32>, vector<2x128xf32> -> vector<2x128xf32>
    %cst_58 = arith.constant dense<0.000000e+00> : vector<2x128xf32>
    %129 = tpu.matmul %123, %8, %cst_58 {dimension_numbers = #tpu.dot_dimension_numbers<[1], [0], [0], [1], [0, 0, 1, 1], [], []>} : vector<2x32xf32>, vector<32x128xf32>, vector<2x128xf32> -> vector<2x128xf32>
    %130 = arith.addf %126, %128 : vector<2x128xf32>
    %131 = arith.addf %127, %129 : vector<2x128xf32>
    %132 = tpu.concatenate %130, %131 in 0 : vector<2x128xf32>, vector<2x128xf32> -> vector<4x128xf32>
    %133 = vector.extract_strided_slice %132 {offsets = [0, 0], sizes = [4, 32], strides = [1, 1]} : vector<4x128xf32> to vector<4x32xf32>
    %134 = arith.negf %133 : vector<4x32xf32>
    %135 = math.exp %134 : vector<4x32xf32>
    %cst_59 = arith.constant 1.000000e+00 : f32
    %136 = vector.broadcast %cst_59 : f32 to vector<4x32xf32>
    %137 = arith.addf %136, %135 : vector<4x32xf32>
    %138 = arith.divf %136, %137 : vector<4x32xf32>
    %139 = vector.extract_strided_slice %132 {offsets = [0, 32], sizes = [4, 32], strides = [1, 1]} : vector<4x128xf32> to vector<4x32xf32>
    %140 = arith.negf %139 : vector<4x32xf32>
    %141 = math.exp %140 : vector<4x32xf32>
    %cst_60 = arith.constant 1.000000e+00 : f32
    %142 = vector.broadcast %cst_60 : f32 to vector<4x32xf32>
    %143 = arith.addf %142, %141 : vector<4x32xf32>
    %144 = arith.divf %142, %143 : vector<4x32xf32>
    %145 = vector.extract_strided_slice %132 {offsets = [0, 64], sizes = [4, 32], strides = [1, 1]} : vector<4x128xf32> to vector<4x32xf32>
    %146 = math.tanh %145 : vector<4x32xf32>
    %147 = vector.extract_strided_slice %132 {offsets = [0, 96], sizes = [4, 32], strides = [1, 1]} : vector<4x128xf32> to vector<4x32xf32>
    %148 = arith.negf %147 : vector<4x32xf32>
    %149 = math.exp %148 : vector<4x32xf32>
    %cst_61 = arith.constant 1.000000e+00 : f32
    %150 = vector.broadcast %cst_61 : f32 to vector<4x32xf32>
    %151 = arith.addf %150, %149 : vector<4x32xf32>
    %152 = arith.divf %150, %151 : vector<4x32xf32>
    %153 = arith.mulf %144, %119 : vector<4x32xf32>
    %154 = arith.mulf %138, %146 : vector<4x32xf32>
    %155 = arith.addf %153, %154 : vector<4x32xf32>
    %156 = math.tanh %155 : vector<4x32xf32>
    %157 = arith.mulf %152, %156 : vector<4x32xf32>
    %158 = vector.extract_strided_slice %157 {offsets = [0, 0], sizes = [2, 32], strides = [1, 1]} : vector<4x32xf32> to vector<2x32xf32>
    %159 = vector.extract_strided_slice %157 {offsets = [2, 0], sizes = [2, 32], strides = [1, 1]} : vector<4x32xf32> to vector<2x32xf32>
    %c6_62 = arith.constant 6 : index
    %c0_63 = arith.constant 0 : index
    %160 = vector.load %arg11[%c6_62, %c0_63] : memref<16x32xf32, #tpu.memory_space<vmem>>, vector<2x32xf32>
    tpu.vector_store %arg11[%c6_62, %c0_63], %158 {strides = array<i32>} : memref<16x32xf32, #tpu.memory_space<vmem>>, vector<2x32xf32>,
    %c8_64 = arith.constant 8 : index
    %c0_65 = arith.constant 0 : index
    %161 = vector.load %arg12[%c8_64, %c0_65] : memref<16x32xf32, #tpu.memory_space<vmem>>, vector<2x32xf32>
    tpu.vector_store %arg12[%c8_64, %c0_65], %159 {strides = array<i32>} : memref<16x32xf32, #tpu.memory_space<vmem>>, vector<2x32xf32>,
    %c8_66 = arith.constant 8 : index
    %c0_67 = arith.constant 0 : index
    %162 = vector.load %arg10[%c8_66, %c0_67] : memref<16x256xf32, #tpu.memory_space<vmem>>, vector<2x128xf32>
    %c6_68 = arith.constant 6 : index
    %c128_69 = arith.constant 128 : index
    %163 = vector.load %arg10[%c6_68, %c128_69] : memref<16x256xf32, #tpu.memory_space<vmem>>, vector<2x128xf32>
    %cst_70 = arith.constant dense<0.000000e+00> : vector<2x128xf32>
    %164 = tpu.matmul %158, %7, %cst_70 {dimension_numbers = #tpu.dot_dimension_numbers<[1], [0], [0], [1], [0, 0, 1, 1], [], []>} : vector<2x32xf32>, vector<32x128xf32>, vector<2x128xf32> -> vector<2x128xf32>
    %cst_71 = arith.constant dense<0.000000e+00> : vector<2x128xf32>
    %165 = tpu.matmul %159, %8, %cst_71 {dimension_numbers = #tpu.dot_dimension_numbers<[1], [0], [0], [1], [0, 0, 1, 1], [], []>} : vector<2x32xf32>, vector<32x128xf32>, vector<2x128xf32> -> vector<2x128xf32>
    %166 = arith.addf %162, %164 : vector<2x128xf32>
    %167 = arith.addf %163, %165 : vector<2x128xf32>
    %168 = tpu.concatenate %166, %167 in 0 : vector<2x128xf32>, vector<2x128xf32> -> vector<4x128xf32>
    %169 = vector.extract_strided_slice %168 {offsets = [0, 0], sizes = [4, 32], strides = [1, 1]} : vector<4x128xf32> to vector<4x32xf32>
    %170 = arith.negf %169 : vector<4x32xf32>
    %171 = math.exp %170 : vector<4x32xf32>
    %cst_72 = arith.constant 1.000000e+00 : f32
    %172 = vector.broadcast %cst_72 : f32 to vector<4x32xf32>
    %173 = arith.addf %172, %171 : vector<4x32xf32>
    %174 = arith.divf %172, %173 : vector<4x32xf32>
    %175 = vector.extract_strided_slice %168 {offsets = [0, 32], sizes = [4, 32], strides = [1, 1]} : vector<4x128xf32> to vector<4x32xf32>
    %176 = arith.negf %175 : vector<4x32xf32>
    %177 = math.exp %176 : vector<4x32xf32>
    %cst_73 = arith.constant 1.000000e+00 : f32
    %178 = vector.broadcast %cst_73 : f32 to vector<4x32xf32>
    %179 = arith.addf %178, %177 : vector<4x32xf32>
    %180 = arith.divf %178, %179 : vector<4x32xf32>
    %181 = vector.extract_strided_slice %168 {offsets = [0, 64], sizes = [4, 32], strides = [1, 1]} : vector<4x128xf32> to vector<4x32xf32>
    %182 = math.tanh %181 : vector<4x32xf32>
    %183 = vector.extract_strided_slice %168 {offsets = [0, 96], sizes = [4, 32], strides = [1, 1]} : vector<4x128xf32> to vector<4x32xf32>
    %184 = arith.negf %183 : vector<4x32xf32>
    %185 = math.exp %184 : vector<4x32xf32>
    %cst_74 = arith.constant 1.000000e+00 : f32
    %186 = vector.broadcast %cst_74 : f32 to vector<4x32xf32>
    %187 = arith.addf %186, %185 : vector<4x32xf32>
    %188 = arith.divf %186, %187 : vector<4x32xf32>
    %189 = arith.mulf %180, %155 : vector<4x32xf32>
    %190 = arith.mulf %174, %182 : vector<4x32xf32>
    %191 = arith.addf %189, %190 : vector<4x32xf32>
    %192 = math.tanh %191 : vector<4x32xf32>
    %193 = arith.mulf %188, %192 : vector<4x32xf32>
    %194 = vector.extract_strided_slice %193 {offsets = [0, 0], sizes = [2, 32], strides = [1, 1]} : vector<4x32xf32> to vector<2x32xf32>
    %195 = vector.extract_strided_slice %193 {offsets = [2, 0], sizes = [2, 32], strides = [1, 1]} : vector<4x32xf32> to vector<2x32xf32>
    %c8_75 = arith.constant 8 : index
    %c0_76 = arith.constant 0 : index
    %196 = vector.load %arg11[%c8_75, %c0_76] : memref<16x32xf32, #tpu.memory_space<vmem>>, vector<2x32xf32>
    tpu.vector_store %arg11[%c8_75, %c0_76], %194 {strides = array<i32>} : memref<16x32xf32, #tpu.memory_space<vmem>>, vector<2x32xf32>,
    %c6_77 = arith.constant 6 : index
    %c0_78 = arith.constant 0 : index
    %197 = vector.load %arg12[%c6_77, %c0_78] : memref<16x32xf32, #tpu.memory_space<vmem>>, vector<2x32xf32>
    tpu.vector_store %arg12[%c6_77, %c0_78], %195 {strides = array<i32>} : memref<16x32xf32, #tpu.memory_space<vmem>>, vector<2x32xf32>,
    %c10_79 = arith.constant 10 : index
    %c0_80 = arith.constant 0 : index
    %198 = vector.load %arg10[%c10_79, %c0_80] : memref<16x256xf32, #tpu.memory_space<vmem>>, vector<2x128xf32>
    %c4_81 = arith.constant 4 : index
    %c128_82 = arith.constant 128 : index
    %199 = vector.load %arg10[%c4_81, %c128_82] : memref<16x256xf32, #tpu.memory_space<vmem>>, vector<2x128xf32>
    %cst_83 = arith.constant dense<0.000000e+00> : vector<2x128xf32>
    %200 = tpu.matmul %194, %7, %cst_83 {dimension_numbers = #tpu.dot_dimension_numbers<[1], [0], [0], [1], [0, 0, 1, 1], [], []>} : vector<2x32xf32>, vector<32x128xf32>, vector<2x128xf32> -> vector<2x128xf32>
    %cst_84 = arith.constant dense<0.000000e+00> : vector<2x128xf32>
    %201 = tpu.matmul %195, %8, %cst_84 {dimension_numbers = #tpu.dot_dimension_numbers<[1], [0], [0], [1], [0, 0, 1, 1], [], []>} : vector<2x32xf32>, vector<32x128xf32>, vector<2x128xf32> -> vector<2x128xf32>
    %202 = arith.addf %198, %200 : vector<2x128xf32>
    %203 = arith.addf %199, %201 : vector<2x128xf32>
    %204 = tpu.concatenate %202, %203 in 0 : vector<2x128xf32>, vector<2x128xf32> -> vector<4x128xf32>
    %205 = vector.extract_strided_slice %204 {offsets = [0, 0], sizes = [4, 32], strides = [1, 1]} : vector<4x128xf32> to vector<4x32xf32>
    %206 = arith.negf %205 : vector<4x32xf32>
    %207 = math.exp %206 : vector<4x32xf32>
    %cst_85 = arith.constant 1.000000e+00 : f32
    %208 = vector.broadcast %cst_85 : f32 to vector<4x32xf32>
    %209 = arith.addf %208, %207 : vector<4x32xf32>
    %210 = arith.divf %208, %209 : vector<4x32xf32>
    %211 = vector.extract_strided_slice %204 {offsets = [0, 32], sizes = [4, 32], strides = [1, 1]} : vector<4x128xf32> to vector<4x32xf32>
    %212 = arith.negf %211 : vector<4x32xf32>
    %213 = math.exp %212 : vector<4x32xf32>
    %cst_86 = arith.constant 1.000000e+00 : f32
    %214 = vector.broadcast %cst_86 : f32 to vector<4x32xf32>
    %215 = arith.addf %214, %213 : vector<4x32xf32>
    %216 = arith.divf %214, %215 : vector<4x32xf32>
    %217 = vector.extract_strided_slice %204 {offsets = [0, 64], sizes = [4, 32], strides = [1, 1]} : vector<4x128xf32> to vector<4x32xf32>
    %218 = math.tanh %217 : vector<4x32xf32>
    %219 = vector.extract_strided_slice %204 {offsets = [0, 96], sizes = [4, 32], strides = [1, 1]} : vector<4x128xf32> to vector<4x32xf32>
    %220 = arith.negf %219 : vector<4x32xf32>
    %221 = math.exp %220 : vector<4x32xf32>
    %cst_87 = arith.constant 1.000000e+00 : f32
    %222 = vector.broadcast %cst_87 : f32 to vector<4x32xf32>
    %223 = arith.addf %222, %221 : vector<4x32xf32>
    %224 = arith.divf %222, %223 : vector<4x32xf32>
    %225 = arith.mulf %216, %191 : vector<4x32xf32>
    %226 = arith.mulf %210, %218 : vector<4x32xf32>
    %227 = arith.addf %225, %226 : vector<4x32xf32>
    %228 = math.tanh %227 : vector<4x32xf32>
    %229 = arith.mulf %224, %228 : vector<4x32xf32>
    %230 = vector.extract_strided_slice %229 {offsets = [0, 0], sizes = [2, 32], strides = [1, 1]} : vector<4x32xf32> to vector<2x32xf32>
    %231 = vector.extract_strided_slice %229 {offsets = [2, 0], sizes = [2, 32], strides = [1, 1]} : vector<4x32xf32> to vector<2x32xf32>
    %c10_88 = arith.constant 10 : index
    %c0_89 = arith.constant 0 : index
    %232 = vector.load %arg11[%c10_88, %c0_89] : memref<16x32xf32, #tpu.memory_space<vmem>>, vector<2x32xf32>
    tpu.vector_store %arg11[%c10_88, %c0_89], %230 {strides = array<i32>} : memref<16x32xf32, #tpu.memory_space<vmem>>, vector<2x32xf32>,
    %c4_90 = arith.constant 4 : index
    %c0_91 = arith.constant 0 : index
    %233 = vector.load %arg12[%c4_90, %c0_91] : memref<16x32xf32, #tpu.memory_space<vmem>>, vector<2x32xf32>
    tpu.vector_store %arg12[%c4_90, %c0_91], %231 {strides = array<i32>} : memref<16x32xf32, #tpu.memory_space<vmem>>, vector<2x32xf32>,
    %c12_92 = arith.constant 12 : index
    %c0_93 = arith.constant 0 : index
    %234 = vector.load %arg10[%c12_92, %c0_93] : memref<16x256xf32, #tpu.memory_space<vmem>>, vector<2x128xf32>
    %c2_94 = arith.constant 2 : index
    %c128_95 = arith.constant 128 : index
    %235 = vector.load %arg10[%c2_94, %c128_95] : memref<16x256xf32, #tpu.memory_space<vmem>>, vector<2x128xf32>
    %cst_96 = arith.constant dense<0.000000e+00> : vector<2x128xf32>
    %236 = tpu.matmul %230, %7, %cst_96 {dimension_numbers = #tpu.dot_dimension_numbers<[1], [0], [0], [1], [0, 0, 1, 1], [], []>} : vector<2x32xf32>, vector<32x128xf32>, vector<2x128xf32> -> vector<2x128xf32>
    %cst_97 = arith.constant dense<0.000000e+00> : vector<2x128xf32>
    %237 = tpu.matmul %231, %8, %cst_97 {dimension_numbers = #tpu.dot_dimension_numbers<[1], [0], [0], [1], [0, 0, 1, 1], [], []>} : vector<2x32xf32>, vector<32x128xf32>, vector<2x128xf32> -> vector<2x128xf32>
    %238 = arith.addf %234, %236 : vector<2x128xf32>
    %239 = arith.addf %235, %237 : vector<2x128xf32>
    %240 = tpu.concatenate %238, %239 in 0 : vector<2x128xf32>, vector<2x128xf32> -> vector<4x128xf32>
    %241 = vector.extract_strided_slice %240 {offsets = [0, 0], sizes = [4, 32], strides = [1, 1]} : vector<4x128xf32> to vector<4x32xf32>
    %242 = arith.negf %241 : vector<4x32xf32>
    %243 = math.exp %242 : vector<4x32xf32>
    %cst_98 = arith.constant 1.000000e+00 : f32
    %244 = vector.broadcast %cst_98 : f32 to vector<4x32xf32>
    %245 = arith.addf %244, %243 : vector<4x32xf32>
    %246 = arith.divf %244, %245 : vector<4x32xf32>
    %247 = vector.extract_strided_slice %240 {offsets = [0, 32], sizes = [4, 32], strides = [1, 1]} : vector<4x128xf32> to vector<4x32xf32>
    %248 = arith.negf %247 : vector<4x32xf32>
    %249 = math.exp %248 : vector<4x32xf32>
    %cst_99 = arith.constant 1.000000e+00 : f32
    %250 = vector.broadcast %cst_99 : f32 to vector<4x32xf32>
    %251 = arith.addf %250, %249 : vector<4x32xf32>
    %252 = arith.divf %250, %251 : vector<4x32xf32>
    %253 = vector.extract_strided_slice %240 {offsets = [0, 64], sizes = [4, 32], strides = [1, 1]} : vector<4x128xf32> to vector<4x32xf32>
    %254 = math.tanh %253 : vector<4x32xf32>
    %255 = vector.extract_strided_slice %240 {offsets = [0, 96], sizes = [4, 32], strides = [1, 1]} : vector<4x128xf32> to vector<4x32xf32>
    %256 = arith.negf %255 : vector<4x32xf32>
    %257 = math.exp %256 : vector<4x32xf32>
    %cst_100 = arith.constant 1.000000e+00 : f32
    %258 = vector.broadcast %cst_100 : f32 to vector<4x32xf32>
    %259 = arith.addf %258, %257 : vector<4x32xf32>
    %260 = arith.divf %258, %259 : vector<4x32xf32>
    %261 = arith.mulf %252, %227 : vector<4x32xf32>
    %262 = arith.mulf %246, %254 : vector<4x32xf32>
    %263 = arith.addf %261, %262 : vector<4x32xf32>
    %264 = math.tanh %263 : vector<4x32xf32>
    %265 = arith.mulf %260, %264 : vector<4x32xf32>
    %266 = vector.extract_strided_slice %265 {offsets = [0, 0], sizes = [2, 32], strides = [1, 1]} : vector<4x32xf32> to vector<2x32xf32>
    %267 = vector.extract_strided_slice %265 {offsets = [2, 0], sizes = [2, 32], strides = [1, 1]} : vector<4x32xf32> to vector<2x32xf32>
    %c12_101 = arith.constant 12 : index
    %c0_102 = arith.constant 0 : index
    %268 = vector.load %arg11[%c12_101, %c0_102] : memref<16x32xf32, #tpu.memory_space<vmem>>, vector<2x32xf32>
    tpu.vector_store %arg11[%c12_101, %c0_102], %266 {strides = array<i32>} : memref<16x32xf32, #tpu.memory_space<vmem>>, vector<2x32xf32>,
    %c2_103 = arith.constant 2 : index
    %c0_104 = arith.constant 0 : index
    %269 = vector.load %arg12[%c2_103, %c0_104] : memref<16x32xf32, #tpu.memory_space<vmem>>, vector<2x32xf32>
    tpu.vector_store %arg12[%c2_103, %c0_104], %267 {strides = array<i32>} : memref<16x32xf32, #tpu.memory_space<vmem>>, vector<2x32xf32>,
    %c14_105 = arith.constant 14 : index
    %c0_106 = arith.constant 0 : index
    %270 = vector.load %arg10[%c14_105, %c0_106] : memref<16x256xf32, #tpu.memory_space<vmem>>, vector<2x128xf32>
    %c0_107 = arith.constant 0 : index
    %c128_108 = arith.constant 128 : index
    %271 = vector.load %arg10[%c0_107, %c128_108] : memref<16x256xf32, #tpu.memory_space<vmem>>, vector<2x128xf32>
    %cst_109 = arith.constant dense<0.000000e+00> : vector<2x128xf32>
    %272 = tpu.matmul %266, %7, %cst_109 {dimension_numbers = #tpu.dot_dimension_numbers<[1], [0], [0], [1], [0, 0, 1, 1], [], []>} : vector<2x32xf32>, vector<32x128xf32>, vector<2x128xf32> -> vector<2x128xf32>
    %cst_110 = arith.constant dense<0.000000e+00> : vector<2x128xf32>
    %273 = tpu.matmul %267, %8, %cst_110 {dimension_numbers = #tpu.dot_dimension_numbers<[1], [0], [0], [1], [0, 0, 1, 1], [], []>} : vector<2x32xf32>, vector<32x128xf32>, vector<2x128xf32> -> vector<2x128xf32>
    %274 = arith.addf %270, %272 : vector<2x128xf32>
    %275 = arith.addf %271, %273 : vector<2x128xf32>
    %276 = tpu.concatenate %274, %275 in 0 : vector<2x128xf32>, vector<2x128xf32> -> vector<4x128xf32>
    %277 = vector.extract_strided_slice %276 {offsets = [0, 0], sizes = [4, 32], strides = [1, 1]} : vector<4x128xf32> to vector<4x32xf32>
    %278 = arith.negf %277 : vector<4x32xf32>
    %279 = math.exp %278 : vector<4x32xf32>
    %cst_111 = arith.constant 1.000000e+00 : f32
    %280 = vector.broadcast %cst_111 : f32 to vector<4x32xf32>
    %281 = arith.addf %280, %279 : vector<4x32xf32>
    %282 = arith.divf %280, %281 : vector<4x32xf32>
    %283 = vector.extract_strided_slice %276 {offsets = [0, 32], sizes = [4, 32], strides = [1, 1]} : vector<4x128xf32> to vector<4x32xf32>
    %284 = arith.negf %283 : vector<4x32xf32>
    %285 = math.exp %284 : vector<4x32xf32>
    %cst_112 = arith.constant 1.000000e+00 : f32
    %286 = vector.broadcast %cst_112 : f32 to vector<4x32xf32>
    %287 = arith.addf %286, %285 : vector<4x32xf32>
    %288 = arith.divf %286, %287 : vector<4x32xf32>
    %289 = vector.extract_strided_slice %276 {offsets = [0, 64], sizes = [4, 32], strides = [1, 1]} : vector<4x128xf32> to vector<4x32xf32>
    %290 = math.tanh %289 : vector<4x32xf32>
    %291 = vector.extract_strided_slice %276 {offsets = [0, 96], sizes = [4, 32], strides = [1, 1]} : vector<4x128xf32> to vector<4x32xf32>
    %292 = arith.negf %291 : vector<4x32xf32>
    %293 = math.exp %292 : vector<4x32xf32>
    %cst_113 = arith.constant 1.000000e+00 : f32
    %294 = vector.broadcast %cst_113 : f32 to vector<4x32xf32>
    %295 = arith.addf %294, %293 : vector<4x32xf32>
    %296 = arith.divf %294, %295 : vector<4x32xf32>
    %297 = arith.mulf %288, %263 : vector<4x32xf32>
    %298 = arith.mulf %282, %290 : vector<4x32xf32>
    %299 = arith.addf %297, %298 : vector<4x32xf32>
    %300 = math.tanh %299 : vector<4x32xf32>
    %301 = arith.mulf %296, %300 : vector<4x32xf32>
    %302 = vector.extract_strided_slice %301 {offsets = [0, 0], sizes = [2, 32], strides = [1, 1]} : vector<4x32xf32> to vector<2x32xf32>
    %303 = vector.extract_strided_slice %301 {offsets = [2, 0], sizes = [2, 32], strides = [1, 1]} : vector<4x32xf32> to vector<2x32xf32>
    %c14_114 = arith.constant 14 : index
    %c0_115 = arith.constant 0 : index
    %304 = vector.load %arg11[%c14_114, %c0_115] : memref<16x32xf32, #tpu.memory_space<vmem>>, vector<2x32xf32>
    tpu.vector_store %arg11[%c14_114, %c0_115], %302 {strides = array<i32>} : memref<16x32xf32, #tpu.memory_space<vmem>>, vector<2x32xf32>,
    %c0_116 = arith.constant 0 : index
    %c0_117 = arith.constant 0 : index
    %305 = vector.load %arg12[%c0_116, %c0_117] : memref<16x32xf32, #tpu.memory_space<vmem>>, vector<2x32xf32>
    tpu.vector_store %arg12[%c0_116, %c0_117], %303 {strides = array<i32>} : memref<16x32xf32, #tpu.memory_space<vmem>>, vector<2x32xf32>,
    %c0_118 = arith.constant 0 : index
    %c0_119 = arith.constant 0 : index
    %306 = vector.load %arg11[%c0_118, %c0_119] : memref<16x32xf32, #tpu.memory_space<vmem>>, vector<16x32xf32>
    %c0_120 = arith.constant 0 : index
    %c0_121 = arith.constant 0 : index
    %307 = vector.load %arg12[%c0_120, %c0_121] : memref<16x32xf32, #tpu.memory_space<vmem>>, vector<16x32xf32>
    %308 = arith.addf %306, %307 : vector<16x32xf32>
    %cst_122 = arith.constant 5.000000e-01 : f32
    %309 = vector.broadcast %cst_122 : f32 to vector<16x32xf32>
    %310 = arith.mulf %308, %309 : vector<16x32xf32>
    %c0_123 = arith.constant 0 : index
    %c0_124 = arith.constant 0 : index
    %311 = vector.load %arg7[%c0_123, %c0_124] : memref<32x8xf32, #tpu.memory_space<vmem>>, vector<32x8xf32>
    %cst_125 = arith.constant dense<0.000000e+00> : vector<16x8xf32>
    %312 = tpu.matmul %310, %311, %cst_125 {dimension_numbers = #tpu.dot_dimension_numbers<[1], [0], [0], [1], [0, 0, 1, 1], [], []>} : vector<16x32xf32>, vector<32x8xf32>, vector<16x8xf32> -> vector<16x8xf32>
    %c0_126 = arith.constant 0 : index
    %c0_127 = arith.constant 0 : index
    %313 = vector.load %arg8[%c0_126, %c0_127] : memref<1x8xf32, #tpu.memory_space<vmem>>, vector<1x8xf32>
    %314 = vector.broadcast %313 : vector<1x8xf32> to vector<16x8xf32>
    %315 = arith.addf %312, %314 : vector<16x8xf32>
    %cst_128 = arith.constant dense<0xFF800000> : vector<16xf32>
    %316 = vector.multi_reduction <maximumf>, %315, %cst_128 [1] : vector<16x8xf32> to vector<16xf32>
    %317 = vector.shape_cast %316 : vector<16xf32> to vector<16x1xf32>
    %318 = vector.broadcast %317 : vector<16x1xf32> to vector<16x8xf32>
    %319 = arith.subf %315, %318 : vector<16x8xf32>
    %320 = math.exp %319 : vector<16x8xf32>
    %cst_129 = arith.constant dense<0.000000e+00> : vector<16xf32>
    %321 = vector.multi_reduction <add>, %320, %cst_129 [1] : vector<16x8xf32> to vector<16xf32>
    %322 = vector.shape_cast %321 : vector<16xf32> to vector<16x1xf32>
    %323 = math.log %322 : vector<16x1xf32>
    %324 = vector.broadcast %323 : vector<16x1xf32> to vector<16x8xf32>
    %325 = arith.subf %319, %324 : vector<16x8xf32>
    %c0_130 = arith.constant 0 : index
    %c0_131 = arith.constant 0 : index
    %326 = vector.load %arg9[%c0_130, %c0_131] : memref<16x8xf32, #tpu.memory_space<vmem>>, vector<16x8xf32>
    tpu.vector_store %arg9[%c0_130, %c0_131], %325 {strides = array<i32>} : memref<16x8xf32, #tpu.memory_space<vmem>>, vector<16x8xf32>,
    return
  }
}

</mosaic_0001>

<llo_original>
// kernel: tpu_custom_call.1
$region0: #{tpu_custom_call.1}
  #allocation0 [shape = 'u32[]', space=smem, size = 0x4, offset = 0x4, fixed_abs, tag = 'smem constant byte address 0x4 - core index']
  #allocation1 [shape = 'u32[144,128]{1,0:T(1,128)}', space=vmem, size = 0x12000, scoped, tag = 'internal scratch']
  #allocation2 [shape = 'f32[16,256]{1,0:T(8,128)}', space=vmem, size = 0x4000, scoped, tag = 'scratch operand']
  #allocation3 [shape = 'f32[16,32]{1,0:T(8,128)}', space=vmem, size = 0x2000, scoped, tag = 'scratch operand']
  #allocation4 [shape = 'f32[16,32]{1,0:T(8,128)}', space=vmem, size = 0x2000, scoped, tag = 'scratch operand']
  %s0 = inlined_call_operand.hbm [shape: f32[16,32], index: 0, kind: input, shape index: {}]
  %s1 = inlined_call_operand.hbm [shape: f32[32,256], index: 1, kind: input, shape index: {}]
  %s2 = inlined_call_operand.vmem [shape: f32[32,128], index: 2, kind: input, shape index: {}]
  %s3 = inlined_call_operand.hbm [shape: f32[32,128], index: 3, kind: input, shape index: {}]
  %s4 = inlined_call_operand.vmem [shape: f32[1,256], index: 4, kind: input, shape index: {}]
  %s5 = inlined_call_operand.vmem [shape: f32[2,2,32], index: 5, kind: input, shape index: {}]
  %s6 = inlined_call_operand.vmem [shape: f32[2,2,32], index: 6, kind: input, shape index: {}]
  %s7 = inlined_call_operand.vmem [shape: f32[32,8], index: 7, kind: input, shape index: {}]
  %s8 = inlined_call_operand.vmem [shape: f32[1,8], index: 8, kind: input, shape index: {}]
  %s9 = inlined_call_operand.vmem [shape: f32[16,8], index: 9, kind: output, shape index: {}]
  %s10 = sld [smem:[#allocation0]]
  $region58: #{tpu_custom_call.1} parent=0
    _
  %s12 = ssub.s32 1, %s10
  %s13 = scalar_select 0, %s12, %s10
  $region1: #{tpu_custom_call.1} parent=0
    #allocation5 [shape = 'u8[8192]{0}', space=vmem, size = 0x2000, scoped, tag = 'input window, operand 0, single buffered']
    #allocation6 [shape = 's32[1]{0}', space=sflag, size = 0x4, scoped, tag = 'scoped memory for tpu_custom_call.1']
    #allocation7 [shape = 'u8[32768]{0}', space=vmem, size = 0x8000, scoped, tag = 'input window, operand 1, single buffered']
    #allocation8 [shape = 's32[1]{0}', space=sflag, size = 0x4, scoped, tag = 'scoped memory for tpu_custom_call.1']
    #allocation9 [shape = 'u8[16384]{0}', space=vmem, size = 0x4000, scoped, tag = 'input window, operand 3, single buffered']
    %14 = vsyncpa [#allocation6], 0
    %15 = vsyncpa [#allocation8], 0
    // Predicated region
    $region2: #{tpu_custom_call.1} parent=1 // pred_check
      _
    $region3: #{tpu_custom_call.1} parent=1 // pred_check_branch
      %17 = sbr.rel (0) target = $region5
    $region4: #{tpu_custom_call.1} parent=1 // pred_region
      %s19 = ssub.s32 256, 256
      %20 = vsyncadd [#allocation6], %s19
      %s21 = sshll.u32 [#allocation5], 4
      %s22 = int_to_ptr.vmem [resolvable:$true] %s21
      %27 = dma.hbm_to_vmem [thread:$0]  %s0, 256, %s22, [#allocation6], 128, 128, 8
    $region5: #{tpu_custom_call.1} parent=1 // pred_fallthru
      _
    // Predicated region
    $region6: #{tpu_custom_call.1} parent=1 // pred_check
      _
    $region7: #{tpu_custom_call.1} parent=1 // pred_check_branch
      %29 = sbr.rel (0) target = $region9
    $region8: #{tpu_custom_call.1} parent=1 // pred_region
      %s31 = ssub.s32 1024, 1024
      %32 = vsyncadd [#allocation8], %s31
      %s33 = sshll.u32 [#allocation7], 4
      %s34 = int_to_ptr.vmem [resolvable:$true] %s33
      %39 = dma.hbm_to_vmem [thread:$0]  %s1, 1024, %s34, [#allocation8], 256, 256, 16
    $region9: #{tpu_custom_call.1} parent=1 // pred_fallthru
      _
    // Predicated region
    $region10: #{tpu_custom_call.1} parent=1 // pred_check
      _
    $region11: #{tpu_custom_call.1} parent=1 // pred_check_branch
      %41 = sbr.rel (0) target = $region13
    $region12: #{tpu_custom_call.1} parent=1 // pred_region
      _
    $region13: #{tpu_custom_call.1} parent=1 // pred_fallthru
      _
    // Predicated region
    $region14: #{tpu_custom_call.1} parent=1 // pred_check
      _
    $region15: #{tpu_custom_call.1} parent=1 // pred_check_branch
      %43 = sbr.rel (0) target = $region17
    $region16: #{tpu_custom_call.1} parent=1 // pred_region
      %s45 = ssub.s32 512, 512
      %46 = vsyncadd [#allocation8], %s45
      %s47 = sshll.u32 [#allocation9], 4
      %s48 = int_to_ptr.vmem [resolvable:$true] %s47
      %53 = dma.hbm_to_vmem [thread:$0]  %s3, 512, %s48, [#allocation8], 128, 128, 8
    $region17: #{tpu_custom_call.1} parent=1 // pred_fallthru
      _
    // Predicated region
    $region18: #{tpu_custom_call.1} parent=1 // pred_check
      _
    $region19: #{tpu_custom_call.1} parent=1 // pred_check_branch
      %55 = sbr.rel (0) target = $region21
    $region20: #{tpu_custom_call.1} parent=1 // pred_region
      _
    $region21: #{tpu_custom_call.1} parent=1 // pred_fallthru
      _
    // Predicated region
    $region22: #{tpu_custom_call.1} parent=1 // pred_check
      _
    $region23: #{tpu_custom_call.1} parent=1 // pred_check_branch
      %57 = sbr.rel (0) target = $region25
    $region24: #{tpu_custom_call.1} parent=1 // pred_region
      _
    $region25: #{tpu_custom_call.1} parent=1 // pred_fallthru
      _
    // Predicated region
    $region26: #{tpu_custom_call.1} parent=1 // pred_check
      _
    $region27: #{tpu_custom_call.1} parent=1 // pred_check_branch
      %59 = sbr.rel (0) target = $region29
    $region28: #{tpu_custom_call.1} parent=1 // pred_region
      _
    $region29: #{tpu_custom_call.1} parent=1 // pred_fallthru
      _
    // Predicated region
    $region30: #{tpu_custom_call.1} parent=1 // pred_check
      _
    $region31: #{tpu_custom_call.1} parent=1 // pred_check_branch
      %61 = sbr.rel (0) target = $region33
    $region32: #{tpu_custom_call.1} parent=1 // pred_region
      _
    $region33: #{tpu_custom_call.1} parent=1 // pred_fallthru
      _
    // Predicated region
    $region34: #{tpu_custom_call.1} parent=1 // pred_check
      _
    $region35: #{tpu_custom_call.1} parent=1 // pred_check_branch
      %63 = sbr.rel (0) target = $region37
    $region36: #{tpu_custom_call.1} parent=1 // pred_region
      _
    $region37: #{tpu_custom_call.1} parent=1 // pred_fallthru
      _
    // Predicated region
    $region38: #{tpu_custom_call.1} parent=1 // pred_check
      _
    $region39: #{tpu_custom_call.1} parent=1 // pred_check_branch
      %65 = sbr.rel (0) target = $region41
    $region40: #{tpu_custom_call.1} parent=1 // pred_region
      %66 = dma.done [#allocation6], 256
    $region41: #{tpu_custom_call.1} parent=1 // pred_fallthru
      _
    // Predicated region
    $region42: #{tpu_custom_call.1} parent=1 // pred_check
      _
    $region43: #{tpu_custom_call.1} parent=1 // pred_check_branch
      %68 = sbr.rel (0) target = $region45
    $region44: #{tpu_custom_call.1} parent=1 // pred_region
      %69 = dma.done [#allocation8], 1024
    $region45: #{tpu_custom_call.1} parent=1 // pred_fallthru
      _
    // Predicated region
    $region46: #{tpu_custom_call.1} parent=1 // pred_check
      _
    $region47: #{tpu_custom_call.1} parent=1 // pred_check_branch
      %71 = sbr.rel (0) target = $region49
    $region48: #{tpu_custom_call.1} parent=1 // pred_region
      %72 = dma.done [#allocation8], 512
    $region49: #{tpu_custom_call.1} parent=1 // pred_fallthru
      _
    %v73 = vld [vmem:[#allocation5] sm:$0xff]
    %v74 = vld [vmem:[#allocation5 + $0x8] sm:$0xff]
    %v75 = vld [vmem:[#allocation7] sm:$0xff]
    %v76 = vld [vmem:[#allocation7 + $0x8] sm:$0xff]
    %v77 = vld [vmem:[#allocation7 + $0x10] sm:$0xff]
    %v78 = vld [vmem:[#allocation7 + $0x18] sm:$0xff]
    %v79 = vld [vmem:[#allocation7 + $0x20] sm:$0xff]
    %v80 = vld [vmem:[#allocation7 + $0x28] sm:$0xff]
    %v81 = vld [vmem:[#allocation7 + $0x30] sm:$0xff]
    %v82 = vld [vmem:[#allocation7 + $0x38] sm:$0xff]
    %v83 = vld [vmem:[%s4] sm:$0x3]
    %v85 = vlaneseq
    %v86 = vshrl.u32 %v85, 7
    %v87 = vsub.s32 0, %v86
    %v88 = vrot.slane %v83, %v87
    %v89 = vlaneseq
    %v90 = vshrl.u32 %v89, 7
    %v91 = vsub.s32 1, %v90
    %v92 = vrot.slane %v83, %v91
    %vm95 = vcmask 261120
    %v97 = vsel %vm95, %v73, 0
    %v100 = vsel %vm95, %v74, 0
    %102 = vmatprep.subr.mxu0 0.0
    %103 = vmatpush1.msra.mxu0 0.0
    %104 = vmatprep.subr.mxu0 0.0
    %105 = vmatpush1.msra.mxu0 0.0
    %106 = vmatprep.subr.mxu0 0.0
    %107 = vmatpush1.msra.mxu0 0.0
    %108 = vmatprep.subr.mxu0 0.0
    %109 = vmatpush1.msra.mxu0 0.0
    %110 = vmatprep.subr.mxu0 0.0
    %111 = vmatpush1.msra.mxu0 0.0
    %112 = vmatprep.subr.mxu0 0.0
    %113 = vmatpush1.msra.mxu0 0.0
    %114 = vmatprep.subr.mxu0 0.0
    %115 = vmatpush1.msra.mxu0 0.0
    %116 = vmatprep.subr.mxu0 0.0
    %117 = vmatpush1.msra.mxu0 0.0
    %118 = vmatprep.subr.mxu0 0.0
    %119 = vmatpush1.msra.mxu0 0.0
    %120 = vmatprep.subr.mxu0 0.0
    %121 = vmatpush1.msra.mxu0 0.0
    %122 = vmatprep.subr.mxu0 0.0
    %123 = vmatpush1.msra.mxu0 0.0
    %124 = vmatprep.subr.mxu0 0.0
    %125 = vmatpush1.msra.mxu0 0.0
    %126 = vmatprep.subr.mxu0 %v82
    %127 = vmatpush1.msra.mxu0 %v81
    %128 = vmatprep.subr.mxu0 %v80
    %129 = vmatpush1.msra.mxu0 %v79
    %130 = vmatprep.subr.mxu0 %v78
    %131 = vmatpush1.msra.mxu0 %v77
    %132 = vmatprep.subr.mxu0 %v76
    %133 = vmatpush1.msra.mxu0 %v75
    %134 = vmatprep.subr.mxu0 0.0
    %135 = vmatpush2.msra.mxu0 0.0
    %136 = vmatprep.subr.mxu0 0.0
    %137 = vmatpush2.msra.mxu0 0.0
    %138 = vmatprep.subr.mxu0 0.0
    %139 = vmatpush2.msra.mxu0 0.0
    %140 = vmatprep.subr.mxu0 0.0
    %141 = vmatpush2.msra.mxu0 0.0
    %142 = vmatprep.subr.mxu0 0.0
    %143 = vmatpush2.msra.mxu0 0.0
    %144 = vmatprep.subr.mxu0 0.0
    %145 = vmatpush2.msra.mxu0 0.0
    %146 = vmatprep.subr.mxu0 0.0
    %147 = vmatpush2.msra.mxu0 0.0
    %148 = vmatprep.subr.mxu0 0.0
    %149 = vmatpush2.msra.mxu0 0.0
    %150 = vmatprep.subr.mxu0 0.0
    %151 = vmatpush2.msra.mxu0 0.0
    %152 = vmatprep.subr.mxu0 0.0
    %153 = vmatpush2.msra.mxu0 0.0
    %154 = vmatprep.subr.mxu0 0.0
    %155 = vmatpush2.msra.mxu0 0.0
    %156 = vmatprep.subr.mxu0 0.0
    %157 = vmatpush2.msra.mxu0 0.0
    %158 = vmatprep.subr.mxu0 0.0
    %159 = vmatpush2.msra.mxu0 0.0
    %160 = vmatprep.subr.mxu0 0.0
    %161 = vmatpush2.msra.mxu0 0.0
    %162 = vmatprep.subr.mxu0 0.0
    %163 = vmatpush2.msra.mxu0 0.0
    %164 = vmatprep.subr.mxu0 0.0
    %165 = vmatpush2.msra.mxu0 0.0
    %166 = vmatprep.mubr.f32.mxu0 0.0
    %167 = vmatmul.mubr.f32.gmra.mxu0 %v97
    %v168 = vpop.f32.mrf.mxu0
    %v169 = vadd.f32 %v88, %v168
    %v170 = vpop.f32.mrf.mxu0
    %v171 = vadd.f32 %v92, %v170
    %172 = vmatprep.mubr.f32.mxu0 0.0
    %173 = vmatmul.mubr.f32.gmra.mxu0 %v100
    %v174 = vpop.f32.mrf.mxu0
    %v175 = vadd.f32 %v88, %v174
    %v176 = vpop.f32.mrf.mxu0
    %v177 = vadd.f32 %v92, %v176
    %178 = vdwg.mxu0
    %179 = vst [vmem:[#allocation2] sm:$0xff] %v169
    %180 = vst [vmem:[#allocation2 + $0x8] sm:$0xff] %v171
    %181 = vst [vmem:[#allocation2 + $0x10] sm:$0xff] %v175
    %182 = vst [vmem:[#allocation2 + $0x18] sm:$0xff] %v177
    %v183 = vld [vmem:[%s2] sm:$0xff]
    %v184 = vld [vmem:[%s2 + $0x8] sm:$0xff]
    %v185 = vld [vmem:[%s2 + $0x10] sm:$0xff]
    %v186 = vld [vmem:[%s2 + $0x18] sm:$0xff]
    %v187 = vld [vmem:[#allocation9] sm:$0xff]
    %v188 = vld [vmem:[#allocation9 + $0x8] sm:$0xff]
    %v189 = vld [vmem:[#allocation9 + $0x10] sm:$0xff]
    %v190 = vld [vmem:[#allocation9 + $0x18] sm:$0xff]
    %v191 = vld [vmem:[%s5] sm:$0x3]
    %s192 = scalar_lea.vmem %s5, 2
    %v193 = vld [vmem:[%s192] sm:$0x3]
    %v194 = vld [vmem:[%s6] sm:$0x3]
    %s195 = scalar_lea.vmem %s6, 2
    %v196 = vld [vmem:[%s195] sm:$0x3]
    %v198 = vrot.slane %v196, 6
    %vm200 = vcmask 1041408
    %v201 = vsel %vm200, %v194, %v198
    %v202 = vld [vmem:[#allocation2] sm:$0x3]
    %v203 = vld [vmem:[#allocation2 + $0x18] sm:$0xc0]
    %v205 = vsel %vm95, %v191, 0
    %207 = vmatprep.subr.mxu0 0.0
    %208 = vmatpush1.msra.mxu0 0.0
    %209 = vmatprep.subr.mxu0 0.0
    %210 = vmatpush1.msra.mxu0 0.0
    %211 = vmatprep.subr.mxu0 0.0
    %212 = vmatpush1.msra.mxu0 0.0
    %213 = vmatprep.subr.mxu0 0.0
    %214 = vmatpush1.msra.mxu0 0.0
    %215 = vmatprep.subr.mxu0 0.0
    %216 = vmatpush1.msra.mxu0 0.0
    %217 = vmatprep.subr.mxu0 0.0
    %218 = vmatpush1.msra.mxu0 0.0
    %219 = vmatprep.subr.mxu0 0.0
    %220 = vmatpush1.msra.mxu0 0.0
    %221 = vmatprep.subr.mxu0 0.0
    %222 = vmatpush1.msra.mxu0 0.0
    %223 = vmatprep.subr.mxu0 0.0
    %224 = vmatpush1.msra.mxu0 0.0
    %225 = vmatprep.subr.mxu0 0.0
    %226 = vmatpush1.msra.mxu0 0.0
    %227 = vmatprep.subr.mxu0 0.0
    %228 = vmatpush1.msra.mxu0 0.0
    %229 = vmatprep.subr.mxu0 0.0
    %230 = vmatpush1.msra.mxu0 0.0
    %231 = vmatprep.subr.mxu0 0.0
    %232 = vmatpush1.msra.mxu0 %v186
    %233 = vmatprep.subr.mxu0 0.0
    %234 = vmatpush1.msra.mxu0 %v185
    %235 = vmatprep.subr.mxu0 0.0
    %236 = vmatpush1.msra.mxu0 %v184
    %237 = vmatprep.subr.mxu0 0.0
    %238 = vmatpush1.msra.mxu0 %v183
    %239 = vmatprep.subr.mxu0 0.0
    %240 = vmatpush2.msra.mxu0 0.0
    %241 = vmatprep.subr.mxu0 0.0
    %242 = vmatpush2.msra.mxu0 0.0
    %243 = vmatprep.subr.mxu0 0.0
    %244 = vmatpush2.msra.mxu0 0.0
    %245 = vmatprep.subr.mxu0 0.0
    %246 = vmatpush2.msra.mxu0 0.0
    %247 = vmatprep.subr.mxu0 0.0
    %248 = vmatpush2.msra.mxu0 0.0
    %249 = vmatprep.subr.mxu0 0.0
    %250 = vmatpush2.msra.mxu0 0.0
    %251 = vmatprep.subr.mxu0 0.0
    %252 = vmatpush2.msra.mxu0 0.0
    %253 = vmatprep.subr.mxu0 0.0
    %254 = vmatpush2.msra.mxu0 0.0
    %255 = vmatprep.subr.mxu0 0.0
    %256 = vmatpush2.msra.mxu0 0.0
    %257 = vmatprep.subr.mxu0 0.0
    %258 = vmatpush2.msra.mxu0 0.0
    %259 = vmatprep.subr.mxu0 0.0
    %260 = vmatpush2.msra.mxu0 0.0
    %261 = vmatprep.subr.mxu0 0.0
    %262 = vmatpush2.msra.mxu0 0.0
    %263 = vmatprep.subr.mxu0 0.0
    %264 = vmatpush2.msra.mxu0 0.0
    %265 = vmatprep.subr.mxu0 0.0
    %266 = vmatpush2.msra.mxu0 0.0
    %267 = vmatprep.subr.mxu0 0.0
    %268 = vmatpush2.msra.mxu0 0.0
    %269 = vmatprep.subr.mxu0 0.0
    %270 = vmatpush2.msra.mxu0 0.0
    %271 = vmatprep.mubr.f32.mxu0 0.0
    %272 = vmatmul.mubr.f32.gmra.mxu0 %v205
    %v273 = vpop.f32.mrf.mxu0
    %v274 = vadd.f32 0.0, %v273
    %v275 = vpop.f32.mrf.mxu0
    %276 = vdwg.mxu0
    %v278 = vsel %vm95, %v193, 0
    %280 = vmatprep.subr.mxu0 0.0
    %281 = vmatpush1.msra.mxu0 0.0
    %282 = vmatprep.subr.mxu0 0.0
    %283 = vmatpush1.msra.mxu0 0.0
    %284 = vmatprep.subr.mxu0 0.0
    %285 = vmatpush1.msra.mxu0 0.0
    %286 = vmatprep.subr.mxu0 0.0
    %287 = vmatpush1.msra.mxu0 0.0
    %288 = vmatprep.subr.mxu0 0.0
    %289 = vmatpush1.msra.mxu0 0.0
    %290 = vmatprep.subr.mxu0 0.0
    %291 = vmatpush1.msra.mxu0 0.0
    %292 = vmatprep.subr.mxu0 0.0
    %293 = vmatpush1.msra.mxu0 0.0
    %294 = vmatprep.subr.mxu0 0.0
    %295 = vmatpush1.msra.mxu0 0.0
    %296 = vmatprep.subr.mxu0 0.0
    %297 = vmatpush1.msra.mxu0 0.0
    %298 = vmatprep.subr.mxu0 0.0
    %299 = vmatpush1.msra.mxu0 0.0
    %300 = vmatprep.subr.mxu0 0.0
    %301 = vmatpush1.msra.mxu0 0.0
    %302 = vmatprep.subr.mxu0 0.0
    %303 = vmatpush1.msra.mxu0 0.0
    %304 = vmatprep.subr.mxu0 0.0
    %305 = vmatpush1.msra.mxu0 %v190
    %306 = vmatprep.subr.mxu0 0.0
    %307 = vmatpush1.msra.mxu0 %v189
    %308 = vmatprep.subr.mxu0 0.0
    %309 = vmatpush1.msra.mxu0 %v188
    %310 = vmatprep.subr.mxu0 0.0
    %311 = vmatpush1.msra.mxu0 %v187
    %312 = vmatprep.subr.mxu0 0.0
    %313 = vmatpush2.msra.mxu0 0.0
    %314 = vmatprep.subr.mxu0 0.0
    %315 = vmatpush2.msra.mxu0 0.0
    %316 = vmatprep.subr.mxu0 0.0
    %317 = vmatpush2.msra.mxu0 0.0
    %318 = vmatprep.subr.mxu0 0.0
    %319 = vmatpush2.msra.mxu0 0.0
    %320 = vmatprep.subr.mxu0 0.0
    %321 = vmatpush2.msra.mxu0 0.0
    %322 = vmatprep.subr.mxu0 0.0
    %323 = vmatpush2.msra.mxu0 0.0
    %324 = vmatprep.subr.mxu0 0.0
    %325 = vmatpush2.msra.mxu0 0.0
    %326 = vmatprep.subr.mxu0 0.0
    %327 = vmatpush2.msra.mxu0 0.0
    %328 = vmatprep.subr.mxu0 0.0
    %329 = vmatpush2.msra.mxu0 0.0
    %330 = vmatprep.subr.mxu0 0.0
    %331 = vmatpush2.msra.mxu0 0.0
    %332 = vmatprep.subr.mxu0 0.0
    %333 = vmatpush2.msra.mxu0 0.0
    %334 = vmatprep.subr.mxu0 0.0
    %335 = vmatpush2.msra.mxu0 0.0
    %336 = vmatprep.subr.mxu0 0.0
    %337 = vmatpush2.msra.mxu0 0.0
    %338 = vmatprep.subr.mxu0 0.0
    %339 = vmatpush2.msra.mxu0 0.0
    %340 = vmatprep.subr.mxu0 0.0
    %341 = vmatpush2.msra.mxu0 0.0
    %342 = vmatprep.subr.mxu0 0.0
    %343 = vmatpush2.msra.mxu0 0.0
    %344 = vmatprep.mubr.f32.mxu0 0.0
    %345 = vmatmul.mubr.f32.gmra.mxu0 %v278
    %v346 = vpop.f32.mrf.mxu0
    %v347 = vadd.f32 0.0, %v346
    %v348 = vpop.f32.mrf.mxu0
    %349 = vdwg.mxu0
    %v350 = vadd.f32 %v202, %v274
    %v352 = vrot.slane %v347, 2
    %v354 = vadd.f32 %v203, %v352
    %v356 = vrot.slane %v354, 4
    %v358 = vsel %vm200, %v350, %v356
    %v359 = vxor.u32 %v358, 2147483648
    %v360 = vmul.f32 %v359, 1.442695
    %v361 = vpow.pop %v360
    %v362 = vadd.f32 %v361, 1.0
    %v363 = vrcp.pop %v362
    %v364 = vmul.f32 1.0, %v363
    %v365 = vtanh.pop %v358
    %367 = vrot.lane.b32.xlu0 %v201, 32
    %v368 = vpop.permute.xlu0 %367
    %v370 = vmul.f32 %v364, %v368
    %372 = vrot.lane.b32.xlu0 %v365, 64
    %v373 = vpop.permute.xlu0 %372
    %v375 = vmul.f32 %v364, %v373
    %377 = vrot.lane.b32.xlu0 %v375, 32
    %v378 = vpop.permute.xlu0 %377
    %v380 = vadd.f32 %v370, %v378
    %v381 = vtanh.pop %v380
    %383 = vrot.lane.b32.xlu0 %v381, 64
    %v384 = vpop.permute.xlu0 %383
    %v386 = vmul.f32 %v364, %v384
    %388 = vrot.lane.b32.xlu0 %v386, 32
    %v389 = vpop.permute.xlu0 %388
    %vm391 = vcmask 254976
    %392 = vst.msk [vmem:[#allocation3] sm:$0x3] %vm391, %v389
    %vm393 = vcmask 257026
    %394 = vst.msk [vmem:[#allocation4 + $0xc] sm:$0xc] %vm393, %v389
    %v395 = vld [vmem:[#allocation2] sm:$0xc]
    %v396 = vld [vmem:[#allocation2 + $0x18] sm:$0x30]
    %v397 = vsel %vm95, %v389, 0
    %399 = vmatprep.subr.mxu0 0.0
    %400 = vmatpush1.msra.mxu0 0.0
    %401 = vmatprep.subr.mxu0 0.0
    %402 = vmatpush1.msra.mxu0 0.0
    %403 = vmatprep.subr.mxu0 0.0
    %404 = vmatpush1.msra.mxu0 0.0
    %405 = vmatprep.subr.mxu0 0.0
    %406 = vmatpush1.msra.mxu0 0.0
    %407 = vmatprep.subr.mxu0 0.0
    %408 = vmatpush1.msra.mxu0 0.0
    %409 = vmatprep.subr.mxu0 0.0
    %410 = vmatpush1.msra.mxu0 0.0
    %411 = vmatprep.subr.mxu0 0.0
    %412 = vmatpush1.msra.mxu0 0.0
    %413 = vmatprep.subr.mxu0 0.0
    %414 = vmatpush1.msra.mxu0 0.0
    %415 = vmatprep.subr.mxu0 0.0
    %416 = vmatpush1.msra.mxu0 0.0
    %417 = vmatprep.subr.mxu0 0.0
    %418 = vmatpush1.msra.mxu0 0.0
    %419 = vmatprep.subr.mxu0 0.0
    %420 = vmatpush1.msra.mxu0 0.0
    %421 = vmatprep.subr.mxu0 0.0
    %422 = vmatpush1.msra.mxu0 0.0
    %423 = vmatprep.subr.mxu0 0.0
    %424 = vmatpush1.msra.mxu0 %v186
    %425 = vmatprep.subr.mxu0 0.0
    %426 = vmatpush1.msra.mxu0 %v185
    %427 = vmatprep.subr.mxu0 0.0
    %428 = vmatpush1.msra.mxu0 %v184
    %429 = vmatprep.subr.mxu0 0.0
    %430 = vmatpush1.msra.mxu0 %v183
    %431 = vmatprep.subr.mxu0 0.0
    %432 = vmatpush2.msra.mxu0 0.0
    %433 = vmatprep.subr.mxu0 0.0
    %434 = vmatpush2.msra.mxu0 0.0
    %435 = vmatprep.subr.mxu0 0.0
    %436 = vmatpush2.msra.mxu0 0.0
    %437 = vmatprep.subr.mxu0 0.0
    %438 = vmatpush2.msra.mxu0 0.0
    %439 = vmatprep.subr.mxu0 0.0
    %440 = vmatpush2.msra.mxu0 0.0
    %441 = vmatprep.subr.mxu0 0.0
    %442 = vmatpush2.msra.mxu0 0.0
    %443 = vmatprep.subr.mxu0 0.0
    %444 = vmatpush2.msra.mxu0 0.0
    %445 = vmatprep.subr.mxu0 0.0
    %446 = vmatpush2.msra.mxu0 0.0
    %447 = vmatprep.subr.mxu0 0.0
    %448 = vmatpush2.msra.mxu0 0.0
    %449 = vmatprep.subr.mxu0 0.0
    %450 = vmatpush2.msra.mxu0 0.0
    %451 = vmatprep.subr.mxu0 0.0
    %452 = vmatpush2.msra.mxu0 0.0
    %453 = vmatprep.subr.mxu0 0.0
    %454 = vmatpush2.msra.mxu0 0.0
    %455 = vmatprep.subr.mxu0 0.0
    %456 = vmatpush2.msra.mxu0 0.0
    %457 = vmatprep.subr.mxu0 0.0
    %458 = vmatpush2.msra.mxu0 0.0
    %459 = vmatprep.subr.mxu0 0.0
    %460 = vmatpush2.msra.mxu0 0.0
    %461 = vmatprep.subr.mxu0 0.0
    %462 = vmatpush2.msra.mxu0 0.0
    %463 = vmatprep.mubr.f32.mxu0 0.0
    %464 = vmatmul.mubr.f32.gmra.mxu0 %v397
    %v465 = vpop.f32.mrf.mxu0
    %v466 = vadd.f32 0.0, %v465
    %v467 = vpop.f32.mrf.mxu0
    %468 = vdwg.mxu0
    %v469 = vrot.slane %v386, 2
    %470 = vrot.lane.b32.xlu0 %v469, 32
    %v471 = vpop.permute.xlu0 %470
    %v472 = vsel %vm95, %v471, 0
    %474 = vmatprep.subr.mxu0 0.0
    %475 = vmatpush1.msra.mxu0 0.0
    %476 = vmatprep.subr.mxu0 0.0
    %477 = vmatpush1.msra.mxu0 0.0
    %478 = vmatprep.subr.mxu0 0.0
    %479 = vmatpush1.msra.mxu0 0.0
    %480 = vmatprep.subr.mxu0 0.0
    %481 = vmatpush1.msra.mxu0 0.0
    %482 = vmatprep.subr.mxu0 0.0
    %483 = vmatpush1.msra.mxu0 0.0
    %484 = vmatprep.subr.mxu0 0.0
    %485 = vmatpush1.msra.mxu0 0.0
    %486 = vmatprep.subr.mxu0 0.0
    %487 = vmatpush1.msra.mxu0 0.0
    %488 = vmatprep.subr.mxu0 0.0
    %489 = vmatpush1.msra.mxu0 0.0
    %490 = vmatprep.subr.mxu0 0.0
    %491 = vmatpush1.msra.mxu0 0.0
    %492 = vmatprep.subr.mxu0 0.0
    %493 = vmatpush1.msra.mxu0 0.0
    %494 = vmatprep.subr.mxu0 0.0
    %495 = vmatpush1.msra.mxu0 0.0
    %496 = vmatprep.subr.mxu0 0.0
    %497 = vmatpush1.msra.mxu0 0.0
    %498 = vmatprep.subr.mxu0 0.0
    %499 = vmatpush1.msra.mxu0 %v190
    %500 = vmatprep.subr.mxu0 0.0
    %501 = vmatpush1.msra.mxu0 %v189
    %502 = vmatprep.subr.mxu0 0.0
    %503 = vmatpush1.msra.mxu0 %v188
    %504 = vmatprep.subr.mxu0 0.0
    %505 = vmatpush1.msra.mxu0 %v187
    %506 = vmatprep.subr.mxu0 0.0
    %507 = vmatpush2.msra.mxu0 0.0
    %508 = vmatprep.subr.mxu0 0.0
    %509 = vmatpush2.msra.mxu0 0.0
    %510 = vmatprep.subr.mxu0 0.0
    %511 = vmatpush2.msra.mxu0 0.0
    %512 = vmatprep.subr.mxu0 0.0
    %513 = vmatpush2.msra.mxu0 0.0
    %514 = vmatprep.subr.mxu0 0.0
    %515 = vmatpush2.msra.mxu0 0.0
    %516 = vmatprep.subr.mxu0 0.0
    %517 = vmatpush2.msra.mxu0 0.0
    %518 = vmatprep.subr.mxu0 0.0
    %519 = vmatpush2.msra.mxu0 0.0
    %520 = vmatprep.subr.mxu0 0.0
    %521 = vmatpush2.msra.mxu0 0.0
    %522 = vmatprep.subr.mxu0 0.0
    %523 = vmatpush2.msra.mxu0 0.0
    %524 = vmatprep.subr.mxu0 0.0
    %525 = vmatpush2.msra.mxu0 0.0
    %526 = vmatprep.subr.mxu0 0.0
    %527 = vmatpush2.msra.mxu0 0.0
    %528 = vmatprep.subr.mxu0 0.0
    %529 = vmatpush2.msra.mxu0 0.0
    %530 = vmatprep.subr.mxu0 0.0
    %531 = vmatpush2.msra.mxu0 0.0
    %532 = vmatprep.subr.mxu0 0.0
    %533 = vmatpush2.msra.mxu0 0.0
    %534 = vmatprep.subr.mxu0 0.0
    %535 = vmatpush2.msra.mxu0 0.0
    %536 = vmatprep.subr.mxu0 0.0
    %537 = vmatpush2.msra.mxu0 0.0
    %538 = vmatprep.mubr.f32.mxu0 0.0
    %539 = vmatmul.mubr.f32.gmra.mxu0 %v472
    %v540 = vpop.f32.mrf.mxu0
    %v541 = vadd.f32 0.0, %v540
    %v542 = vpop.f32.mrf.mxu0
    %543 = vdwg.mxu0
    %v545 = vrot.slane %v466, 6
    %v547 = vadd.f32 %v395, %v545
    %v549 = vrot.slane %v541, 4
    %v551 = vadd.f32 %v396, %v549
    %v553 = vrot.slane %v547, 2
    %v556 = vrot.slane %v551, 2
    %v558 = vsel %vm200, %v553, %v556
    %v559 = vxor.u32 %v558, 2147483648
    %v560 = vmul.f32 %v559, 1.442695
    %v561 = vpow.pop %v560
    %v562 = vadd.f32 %v561, 1.0
    %v563 = vrcp.pop %v562
    %v564 = vmul.f32 1.0, %v563
    %v565 = vtanh.pop %v558
    %v566 = vmul.f32 %v564, %v380
    %568 = vrot.lane.b32.xlu0 %v565, 64
    %v569 = vpop.permute.xlu0 %568
    %v571 = vmul.f32 %v564, %v569
    %573 = vrot.lane.b32.xlu0 %v571, 32
    %v574 = vpop.permute.xlu0 %573
    %v576 = vadd.f32 %v566, %v574
    %v577 = vtanh.pop %v576
    %579 = vrot.lane.b32.xlu0 %v577, 64
    %v580 = vpop.permute.xlu0 %579
    %v582 = vmul.f32 %v564, %v580
    %584 = vrot.lane.b32.xlu0 %v582, 32
    %v585 = vpop.permute.xlu0 %584
    %587 = vst.msk [vmem:[#allocation3 + $0x2] sm:$0x3] %vm391, %v585
    %588 = vst.msk [vmem:[#allocation4 + $0xa] sm:$0xc] %vm393, %v585
    %v589 = vld [vmem:[#allocation2] sm:$0x30]
    %v590 = vld [vmem:[#allocation2 + $0x18] sm:$0xc]
    %v591 = vsel %vm95, %v585, 0
    %593 = vmatprep.subr.mxu0 0.0
    %594 = vmatpush1.msra.mxu0 0.0
    %595 = vmatprep.subr.mxu0 0.0
    %596 = vmatpush1.msra.mxu0 0.0
    %597 = vmatprep.subr.mxu0 0.0
    %598 = vmatpush1.msra.mxu0 0.0
    %599 = vmatprep.subr.mxu0 0.0
    %600 = vmatpush1.msra.mxu0 0.0
    %601 = vmatprep.subr.mxu0 0.0
    %602 = vmatpush1.msra.mxu0 0.0
    %603 = vmatprep.subr.mxu0 0.0
    %604 = vmatpush1.msra.mxu0 0.0
    %605 = vmatprep.subr.mxu0 0.0
    %606 = vmatpush1.msra.mxu0 0.0
    %607 = vmatprep.subr.mxu0 0.0
    %608 = vmatpush1.msra.mxu0 0.0
    %609 = vmatprep.subr.mxu0 0.0
    %610 = vmatpush1.msra.mxu0 0.0
    %611 = vmatprep.subr.mxu0 0.0
    %612 = vmatpush1.msra.mxu0 0.0
    %613 = vmatprep.subr.mxu0 0.0
    %614 = vmatpush1.msra.mxu0 0.0
    %615 = vmatprep.subr.mxu0 0.0
    %616 = vmatpush1.msra.mxu0 0.0
    %617 = vmatprep.subr.mxu0 0.0
    %618 = vmatpush1.msra.mxu0 %v186
    %619 = vmatprep.subr.mxu0 0.0
    %620 = vmatpush1.msra.mxu0 %v185
    %621 = vmatprep.subr.mxu0 0.0
    %622 = vmatpush1.msra.mxu0 %v184
    %623 = vmatprep.subr.mxu0 0.0
    %624 = vmatpush1.msra.mxu0 %v183
    %625 = vmatprep.subr.mxu0 0.0
    %626 = vmatpush2.msra.mxu0 0.0
    %627 = vmatprep.subr.mxu0 0.0
    %628 = vmatpush2.msra.mxu0 0.0
    %629 = vmatprep.subr.mxu0 0.0
    %630 = vmatpush2.msra.mxu0 0.0
    %631 = vmatprep.subr.mxu0 0.0
    %632 = vmatpush2.msra.mxu0 0.0
    %633 = vmatprep.subr.mxu0 0.0
    %634 = vmatpush2.msra.mxu0 0.0
    %635 = vmatprep.subr.mxu0 0.0
    %636 = vmatpush2.msra.mxu0 0.0
    %637 = vmatprep.subr.mxu0 0.0
    %638 = vmatpush2.msra.mxu0 0.0
    %639 = vmatprep.subr.mxu0 0.0
    %640 = vmatpush2.msra.mxu0 0.0
    %641 = vmatprep.subr.mxu0 0.0
    %642 = vmatpush2.msra.mxu0 0.0
    %643 = vmatprep.subr.mxu0 0.0
    %644 = vmatpush2.msra.mxu0 0.0
    %645 = vmatprep.subr.mxu0 0.0
    %646 = vmatpush2.msra.mxu0 0.0
    %647 = vmatprep.subr.mxu0 0.0
    %648 = vmatpush2.msra.mxu0 0.0
    %649 = vmatprep.subr.mxu0 0.0
    %650 = vmatpush2.msra.mxu0 0.0
    %651 = vmatprep.subr.mxu0 0.0
    %652 = vmatpush2.msra.mxu0 0.0
    %653 = vmatprep.subr.mxu0 0.0
    %654 = vmatpush2.msra.mxu0 0.0
    %655 = vmatprep.subr.mxu0 0.0
    %656 = vmatpush2.msra.mxu0 0.0
    %657 = vmatprep.mubr.f32.mxu0 0.0
    %658 = vmatmul.mubr.f32.gmra.mxu0 %v591
    %v659 = vpop.f32.mrf.mxu0
    %v660 = vadd.f32 0.0, %v659
    %v661 = vpop.f32.mrf.mxu0
    %662 = vdwg.mxu0
    %v663 = vrot.slane %v582, 2
    %664 = vrot.lane.b32.xlu0 %v663, 32
    %v665 = vpop.permute.xlu0 %664
    %v666 = vsel %vm95, %v665, 0
    %668 = vmatprep.subr.mxu0 0.0
    %669 = vmatpush1.msra.mxu0 0.0
    %670 = vmatprep.subr.mxu0 0.0
    %671 = vmatpush1.msra.mxu0 0.0
    %672 = vmatprep.subr.mxu0 0.0
    %673 = vmatpush1.msra.mxu0 0.0
    %674 = vmatprep.subr.mxu0 0.0
    %675 = vmatpush1.msra.mxu0 0.0
    %676 = vmatprep.subr.mxu0 0.0
    %677 = vmatpush1.msra.mxu0 0.0
    %678 = vmatprep.subr.mxu0 0.0
    %679 = vmatpush1.msra.mxu0 0.0
    %680 = vmatprep.subr.mxu0 0.0
    %681 = vmatpush1.msra.mxu0 0.0
    %682 = vmatprep.subr.mxu0 0.0
    %683 = vmatpush1.msra.mxu0 0.0
    %684 = vmatprep.subr.mxu0 0.0
    %685 = vmatpush1.msra.mxu0 0.0
    %686 = vmatprep.subr.mxu0 0.0
    %687 = vmatpush1.msra.mxu0 0.0
    %688 = vmatprep.subr.mxu0 0.0
    %689 = vmatpush1.msra.mxu0 0.0
    %690 = vmatprep.subr.mxu0 0.0
    %691 = vmatpush1.msra.mxu0 0.0
    %692 = vmatprep.subr.mxu0 0.0
    %693 = vmatpush1.msra.mxu0 %v190
    %694 = vmatprep.subr.mxu0 0.0
    %695 = vmatpush1.msra.mxu0 %v189
    %696 = vmatprep.subr.mxu0 0.0
    %697 = vmatpush1.msra.mxu0 %v188
    %698 = vmatprep.subr.mxu0 0.0
    %699 = vmatpush1.msra.mxu0 %v187
    %700 = vmatprep.subr.mxu0 0.0
    %701 = vmatpush2.msra.mxu0 0.0
    %702 = vmatprep.subr.mxu0 0.0
    %703 = vmatpush2.msra.mxu0 0.0
    %704 = vmatprep.subr.mxu0 0.0
    %705 = vmatpush2.msra.mxu0 0.0
    %706 = vmatprep.subr.mxu0 0.0
    %707 = vmatpush2.msra.mxu0 0.0
    %708 = vmatprep.subr.mxu0 0.0
    %709 = vmatpush2.msra.mxu0 0.0
    %710 = vmatprep.subr.mxu0 0.0
    %711 = vmatpush2.msra.mxu0 0.0
    %712 = vmatprep.subr.mxu0 0.0
    %713 = vmatpush2.msra.mxu0 0.0
    %714 = vmatprep.subr.mxu0 0.0
    %715 = vmatpush2.msra.mxu0 0.0
    %716 = vmatprep.subr.mxu0 0.0
    %717 = vmatpush2.msra.mxu0 0.0
    %718 = vmatprep.subr.mxu0 0.0
    %719 = vmatpush2.msra.mxu0 0.0
    %720 = vmatprep.subr.mxu0 0.0
    %721 = vmatpush2.msra.mxu0 0.0
    %722 = vmatprep.subr.mxu0 0.0
    %723 = vmatpush2.msra.mxu0 0.0
    %724 = vmatprep.subr.mxu0 0.0
    %725 = vmatpush2.msra.mxu0 0.0
    %726 = vmatprep.subr.mxu0 0.0
    %727 = vmatpush2.msra.mxu0 0.0
    %728 = vmatprep.subr.mxu0 0.0
    %729 = vmatpush2.msra.mxu0 0.0
    %730 = vmatprep.subr.mxu0 0.0
    %731 = vmatpush2.msra.mxu0 0.0
    %732 = vmatprep.mubr.f32.mxu0 0.0
    %733 = vmatmul.mubr.f32.gmra.mxu0 %v666
    %v734 = vpop.f32.mrf.mxu0
    %v735 = vadd.f32 0.0, %v734
    %v736 = vpop.f32.mrf.mxu0
    %737 = vdwg.mxu0
    %v739 = vrot.slane %v660, 4
    %v741 = vadd.f32 %v589, %v739
    %v743 = vrot.slane %v735, 6
    %v745 = vadd.f32 %v590, %v743
    %v747 = vrot.slane %v741, 4
    %v749 = vsel %vm200, %v747, %v745
    %v750 = vxor.u32 %v749, 2147483648
    %v751 = vmul.f32 %v750, 1.442695
    %v752 = vpow.pop %v751
    %v753 = vadd.f32 %v752, 1.0
    %v754 = vrcp.pop %v753
    %v755 = vmul.f32 1.0, %v754
    %v756 = vtanh.pop %v749
    %v757 = vmul.f32 %v755, %v576
    %759 = vrot.lane.b32.xlu0 %v756, 64
    %v760 = vpop.permute.xlu0 %759
    %v762 = vmul.f32 %v755, %v760
    %764 = vrot.lane.b32.xlu0 %v762, 32
    %v765 = vpop.permute.xlu0 %764
    %v767 = vadd.f32 %v757, %v765
    %v768 = vtanh.pop %v767
    %770 = vrot.lane.b32.xlu0 %v768, 64
    %v771 = vpop.permute.xlu0 %770
    %v773 = vmul.f32 %v755, %v771
    %775 = vrot.lane.b32.xlu0 %v773, 32
    %v776 = vpop.permute.xlu0 %775
    %778 = vst.msk [vmem:[#allocation3 + $0x4] sm:$0x3] %vm391, %v776
    %779 = vst.msk [vmem:[#allocation4 + $0x8] sm:$0xc] %vm393, %v776
    %v780 = vld [vmem:[#allocation2] sm:$0xc0]
    %v781 = vld [vmem:[#allocation2 + $0x18] sm:$0x3]
    %v782 = vsel %vm95, %v776, 0
    %784 = vmatprep.subr.mxu0 0.0
    %785 = vmatpush1.msra.mxu0 0.0
    %786 = vmatprep.subr.mxu0 0.0
    %787 = vmatpush1.msra.mxu0 0.0
    %788 = vmatprep.subr.mxu0 0.0
    %789 = vmatpush1.msra.mxu0 0.0
    %790 = vmatprep.subr.mxu0 0.0
    %791 = vmatpush1.msra.mxu0 0.0
    %792 = vmatprep.subr.mxu0 0.0
    %793 = vmatpush1.msra.mxu0 0.0
    %794 = vmatprep.subr.mxu0 0.0
    %795 = vmatpush1.msra.mxu0 0.0
    %796 = vmatprep.subr.mxu0 0.0
    %797 = vmatpush1.msra.mxu0 0.0
    %798 = vmatprep.subr.mxu0 0.0
    %799 = vmatpush1.msra.mxu0 0.0
    %800 = vmatprep.subr.mxu0 0.0
    %801 = vmatpush1.msra.mxu0 0.0
    %802 = vmatprep.subr.mxu0 0.0
    %803 = vmatpush1.msra.mxu0 0.0
    %804 = vmatprep.subr.mxu0 0.0
    %805 = vmatpush1.msra.mxu0 0.0
    %806 = vmatprep.subr.mxu0 0.0
    %807 = vmatpush1.msra.mxu0 0.0
    %808 = vmatprep.subr.mxu0 0.0
    %809 = vmatpush1.msra.mxu0 %v186
    %810 = vmatprep.subr.mxu0 0.0
    %811 = vmatpush1.msra.mxu0 %v185
    %812 = vmatprep.subr.mxu0 0.0
    %813 = vmatpush1.msra.mxu0 %v184
    %814 = vmatprep.subr.mxu0 0.0
    %815 = vmatpush1.msra.mxu0 %v183
    %816 = vmatprep.subr.mxu0 0.0
    %817 = vmatpush2.msra.mxu0 0.0
    %818 = vmatprep.subr.mxu0 0.0
    %819 = vmatpush2.msra.mxu0 0.0
    %820 = vmatprep.subr.mxu0 0.0
    %821 = vmatpush2.msra.mxu0 0.0
    %822 = vmatprep.subr.mxu0 0.0
    %823 = vmatpush2.msra.mxu0 0.0
    %824 = vmatprep.subr.mxu0 0.0
    %825 = vmatpush2.msra.mxu0 0.0
    %826 = vmatprep.subr.mxu0 0.0
    %827 = vmatpush2.msra.mxu0 0.0
    %828 = vmatprep.subr.mxu0 0.0
    %829 = vmatpush2.msra.mxu0 0.0
    %830 = vmatprep.subr.mxu0 0.0
    %831 = vmatpush2.msra.mxu0 0.0
    %832 = vmatprep.subr.mxu0 0.0
    %833 = vmatpush2.msra.mxu0 0.0
    %834 = vmatprep.subr.mxu0 0.0
    %835 = vmatpush2.msra.mxu0 0.0
    %836 = vmatprep.subr.mxu0 0.0
    %837 = vmatpush2.msra.mxu0 0.0
    %838 = vmatprep.subr.mxu0 0.0
    %839 = vmatpush2.msra.mxu0 0.0
    %840 = vmatprep.subr.mxu0 0.0
    %841 = vmatpush2.msra.mxu0 0.0
    %842 = vmatprep.subr.mxu0 0.0
    %843 = vmatpush2.msra.mxu0 0.0
    %844 = vmatprep.subr.mxu0 0.0
    %845 = vmatpush2.msra.mxu0 0.0
    %846 = vmatprep.subr.mxu0 0.0
    %847 = vmatpush2.msra.mxu0 0.0
    %848 = vmatprep.mubr.f32.mxu0 0.0
    %849 = vmatmul.mubr.f32.gmra.mxu0 %v782
    %v850 = vpop.f32.mrf.mxu0
    %v851 = vadd.f32 0.0, %v850
    %v852 = vpop.f32.mrf.mxu0
    %853 = vdwg.mxu0
    %v854 = vrot.slane %v773, 2
    %855 = vrot.lane.b32.xlu0 %v854, 32
    %v856 = vpop.permute.xlu0 %855
    %v857 = vsel %vm95, %v856, 0
    %859 = vmatprep.subr.mxu0 0.0
    %860 = vmatpush1.msra.mxu0 0.0
    %861 = vmatprep.subr.mxu0 0.0
    %862 = vmatpush1.msra.mxu0 0.0
    %863 = vmatprep.subr.mxu0 0.0
    %864 = vmatpush1.msra.mxu0 0.0
    %865 = vmatprep.subr.mxu0 0.0
    %866 = vmatpush1.msra.mxu0 0.0
    %867 = vmatprep.subr.mxu0 0.0
    %868 = vmatpush1.msra.mxu0 0.0
    %869 = vmatprep.subr.mxu0 0.0
    %870 = vmatpush1.msra.mxu0 0.0
    %871 = vmatprep.subr.mxu0 0.0
    %872 = vmatpush1.msra.mxu0 0.0
    %873 = vmatprep.subr.mxu0 0.0
    %874 = vmatpush1.msra.mxu0 0.0
    %875 = vmatprep.subr.mxu0 0.0
    %876 = vmatpush1.msra.mxu0 0.0
    %877 = vmatprep.subr.mxu0 0.0
    %878 = vmatpush1.msra.mxu0 0.0
    %879 = vmatprep.subr.mxu0 0.0
    %880 = vmatpush1.msra.mxu0 0.0
    %881 = vmatprep.subr.mxu0 0.0
    %882 = vmatpush1.msra.mxu0 0.0
    %883 = vmatprep.subr.mxu0 0.0
    %884 = vmatpush1.msra.mxu0 %v190
    %885 = vmatprep.subr.mxu0 0.0
    %886 = vmatpush1.msra.mxu0 %v189
    %887 = vmatprep.subr.mxu0 0.0
    %888 = vmatpush1.msra.mxu0 %v188
    %889 = vmatprep.subr.mxu0 0.0
    %890 = vmatpush1.msra.mxu0 %v187
    %891 = vmatprep.subr.mxu0 0.0
    %892 = vmatpush2.msra.mxu0 0.0
    %893 = vmatprep.subr.mxu0 0.0
    %894 = vmatpush2.msra.mxu0 0.0
    %895 = vmatprep.subr.mxu0 0.0
    %896 = vmatpush2.msra.mxu0 0.0
    %897 = vmatprep.subr.mxu0 0.0
    %898 = vmatpush2.msra.mxu0 0.0
    %899 = vmatprep.subr.mxu0 0.0
    %900 = vmatpush2.msra.mxu0 0.0
    %901 = vmatprep.subr.mxu0 0.0
    %902 = vmatpush2.msra.mxu0 0.0
    %903 = vmatprep.subr.mxu0 0.0
    %904 = vmatpush2.msra.mxu0 0.0
    %905 = vmatprep.subr.mxu0 0.0
    %906 = vmatpush2.msra.mxu0 0.0
    %907 = vmatprep.subr.mxu0 0.0
    %908 = vmatpush2.msra.mxu0 0.0
    %909 = vmatprep.subr.mxu0 0.0
    %910 = vmatpush2.msra.mxu0 0.0
    %911 = vmatprep.subr.mxu0 0.0
    %912 = vmatpush2.msra.mxu0 0.0
    %913 = vmatprep.subr.mxu0 0.0
    %914 = vmatpush2.msra.mxu0 0.0
    %915 = vmatprep.subr.mxu0 0.0
    %916 = vmatpush2.msra.mxu0 0.0
    %917 = vmatprep.subr.mxu0 0.0
    %918 = vmatpush2.msra.mxu0 0.0
    %919 = vmatprep.subr.mxu0 0.0
    %920 = vmatpush2.msra.mxu0 0.0
    %921 = vmatprep.subr.mxu0 0.0
    %922 = vmatpush2.msra.mxu0 0.0
    %923 = vmatprep.mubr.f32.mxu0 0.0
    %924 = vmatmul.mubr.f32.gmra.mxu0 %v857
    %v925 = vpop.f32.mrf.mxu0
    %v926 = vadd.f32 0.0, %v925
    %v927 = vpop.f32.mrf.mxu0
    %928 = vdwg.mxu0
    %v930 = vrot.slane %v851, 2
    %v932 = vadd.f32 %v780, %v930
    %v933 = vadd.f32 %v781, %v926
    %v935 = vrot.slane %v932, 6
    %v938 = vrot.slane %v933, 6
    %v940 = vsel %vm200, %v935, %v938
    %v941 = vxor.u32 %v940, 2147483648
    %v942 = vmul.f32 %v941, 1.442695
    %v943 = vpow.pop %v942
    %v944 = vadd.f32 %v943, 1.0
    %v945 = vrcp.pop %v944
    %v946 = vmul.f32 1.0, %v945
    %v947 = vtanh.pop %v940
    %v948 = vmul.f32 %v946, %v767
    %950 = vrot.lane.b32.xlu0 %v947, 64
    %v951 = vpop.permute.xlu0 %950
    %v953 = vmul.f32 %v946, %v951
    %955 = vrot.lane.b32.xlu0 %v953, 32
    %v956 = vpop.permute.xlu0 %955
    %v958 = vadd.f32 %v948, %v956
    %v959 = vtanh.pop %v958
    %961 = vrot.lane.b32.xlu0 %v959, 64
    %v962 = vpop.permute.xlu0 %961
    %v964 = vmul.f32 %v946, %v962
    %966 = vrot.lane.b32.xlu0 %v964, 32
    %v967 = vpop.permute.xlu0 %966
    %969 = vst.msk [vmem:[#allocation3 + $0x6] sm:$0x3] %vm391, %v967
    %970 = vst.msk [vmem:[#allocation4 + $0x6] sm:$0xc] %vm393, %v967
    %v971 = vld [vmem:[#allocation2 + $0x10] sm:$0x3]
    %v972 = vld [vmem:[#allocation2 + $0x8] sm:$0xc0]
    %v973 = vsel %vm95, %v967, 0
    %975 = vmatprep.subr.mxu0 0.0
    %976 = vmatpush1.msra.mxu0 0.0
    %977 = vmatprep.subr.mxu0 0.0
    %978 = vmatpush1.msra.mxu0 0.0
    %979 = vmatprep.subr.mxu0 0.0
    %980 = vmatpush1.msra.mxu0 0.0
    %981 = vmatprep.subr.mxu0 0.0
    %982 = vmatpush1.msra.mxu0 0.0
    %983 = vmatprep.subr.mxu0 0.0
    %984 = vmatpush1.msra.mxu0 0.0
    %985 = vmatprep.subr.mxu0 0.0
    %986 = vmatpush1.msra.mxu0 0.0
    %987 = vmatprep.subr.mxu0 0.0
    %988 = vmatpush1.msra.mxu0 0.0
    %989 = vmatprep.subr.mxu0 0.0
    %990 = vmatpush1.msra.mxu0 0.0
    %991 = vmatprep.subr.mxu0 0.0
    %992 = vmatpush1.msra.mxu0 0.0
    %993 = vmatprep.subr.mxu0 0.0
    %994 = vmatpush1.msra.mxu0 0.0
    %995 = vmatprep.subr.mxu0 0.0
    %996 = vmatpush1.msra.mxu0 0.0
    %997 = vmatprep.subr.mxu0 0.0
    %998 = vmatpush1.msra.mxu0 0.0
    %999 = vmatprep.subr.mxu0 0.0
    %1000 = vmatpush1.msra.mxu0 %v186
    %1001 = vmatprep.subr.mxu0 0.0
    %1002 = vmatpush1.msra.mxu0 %v185
    %1003 = vmatprep.subr.mxu0 0.0
    %1004 = vmatpush1.msra.mxu0 %v184
    %1005 = vmatprep.subr.mxu0 0.0
    %1006 = vmatpush1.msra.mxu0 %v183
    %1007 = vmatprep.subr.mxu0 0.0
    %1008 = vmatpush2.msra.mxu0 0.0
    %1009 = vmatprep.subr.mxu0 0.0
    %1010 = vmatpush2.msra.mxu0 0.0
    %1011 = vmatprep.subr.mxu0 0.0
    %1012 = vmatpush2.msra.mxu0 0.0
    %1013 = vmatprep.subr.mxu0 0.0
    %1014 = vmatpush2.msra.mxu0 0.0
    %1015 = vmatprep.subr.mxu0 0.0
    %1016 = vmatpush2.msra.mxu0 0.0
    %1017 = vmatprep.subr.mxu0 0.0
    %1018 = vmatpush2.msra.mxu0 0.0
    %1019 = vmatprep.subr.mxu0 0.0
    %1020 = vmatpush2.msra.mxu0 0.0
    %1021 = vmatprep.subr.mxu0 0.0
    %1022 = vmatpush2.msra.mxu0 0.0
    %1023 = vmatprep.subr.mxu0 0.0
    %1024 = vmatpush2.msra.mxu0 0.0
    %1025 = vmatprep.subr.mxu0 0.0
    %1026 = vmatpush2.msra.mxu0 0.0
    %1027 = vmatprep.subr.mxu0 0.0
    %1028 = vmatpush2.msra.mxu0 0.0
    %1029 = vmatprep.subr.mxu0 0.0
    %1030 = vmatpush2.msra.mxu0 0.0
    %1031 = vmatprep.subr.mxu0 0.0
    %1032 = vmatpush2.msra.mxu0 0.0
    %1033 = vmatprep.subr.mxu0 0.0
    %1034 = vmatpush2.msra.mxu0 0.0
    %1035 = vmatprep.subr.mxu0 0.0
    %1036 = vmatpush2.msra.mxu0 0.0
    %1037 = vmatprep.subr.mxu0 0.0
    %1038 = vmatpush2.msra.mxu0 0.0
    %1039 = vmatprep.mubr.f32.mxu0 0.0
    %1040 = vmatmul.mubr.f32.gmra.mxu0 %v973
    %v1041 = vpop.f32.mrf.mxu0
    %v1042 = vadd.f32 0.0, %v1041
    %v1043 = vpop.f32.mrf.mxu0
    %1044 = vdwg.mxu0
    %v1045 = vrot.slane %v964, 2
    %1046 = vrot.lane.b32.xlu0 %v1045, 32
    %v1047 = vpop.permute.xlu0 %1046
    %v1048 = vsel %vm95, %v1047, 0
    %1050 = vmatprep.subr.mxu0 0.0
    %1051 = vmatpush1.msra.mxu0 0.0
    %1052 = vmatprep.subr.mxu0 0.0
    %1053 = vmatpush1.msra.mxu0 0.0
    %1054 = vmatprep.subr.mxu0 0.0
    %1055 = vmatpush1.msra.mxu0 0.0
    %1056 = vmatprep.subr.mxu0 0.0
    %1057 = vmatpush1.msra.mxu0 0.0
    %1058 = vmatprep.subr.mxu0 0.0
    %1059 = vmatpush1.msra.mxu0 0.0
    %1060 = vmatprep.subr.mxu0 0.0
    %1061 = vmatpush1.msra.mxu0 0.0
    %1062 = vmatprep.subr.mxu0 0.0
    %1063 = vmatpush1.msra.mxu0 0.0
    %1064 = vmatprep.subr.mxu0 0.0
    %1065 = vmatpush1.msra.mxu0 0.0
    %1066 = vmatprep.subr.mxu0 0.0
    %1067 = vmatpush1.msra.mxu0 0.0
    %1068 = vmatprep.subr.mxu0 0.0
    %1069 = vmatpush1.msra.mxu0 0.0
    %1070 = vmatprep.subr.mxu0 0.0
    %1071 = vmatpush1.msra.mxu0 0.0
    %1072 = vmatprep.subr.mxu0 0.0
    %1073 = vmatpush1.msra.mxu0 0.0
    %1074 = vmatprep.subr.mxu0 0.0
    %1075 = vmatpush1.msra.mxu0 %v190
    %1076 = vmatprep.subr.mxu0 0.0
    %1077 = vmatpush1.msra.mxu0 %v189
    %1078 = vmatprep.subr.mxu0 0.0
    %1079 = vmatpush1.msra.mxu0 %v188
    %1080 = vmatprep.subr.mxu0 0.0
    %1081 = vmatpush1.msra.mxu0 %v187
    %1082 = vmatprep.subr.mxu0 0.0
    %1083 = vmatpush2.msra.mxu0 0.0
    %1084 = vmatprep.subr.mxu0 0.0
    %1085 = vmatpush2.msra.mxu0 0.0
    %1086 = vmatprep.subr.mxu0 0.0
    %1087 = vmatpush2.msra.mxu0 0.0
    %1088 = vmatprep.subr.mxu0 0.0
    %1089 = vmatpush2.msra.mxu0 0.0
    %1090 = vmatprep.subr.mxu0 0.0
    %1091 = vmatpush2.msra.mxu0 0.0
    %1092 = vmatprep.subr.mxu0 0.0
    %1093 = vmatpush2.msra.mxu0 0.0
    %1094 = vmatprep.subr.mxu0 0.0
    %1095 = vmatpush2.msra.mxu0 0.0
    %1096 = vmatprep.subr.mxu0 0.0
    %1097 = vmatpush2.msra.mxu0 0.0
    %1098 = vmatprep.subr.mxu0 0.0
    %1099 = vmatpush2.msra.mxu0 0.0
    %1100 = vmatprep.subr.mxu0 0.0
    %1101 = vmatpush2.msra.mxu0 0.0
    %1102 = vmatprep.subr.mxu0 0.0
    %1103 = vmatpush2.msra.mxu0 0.0
    %1104 = vmatprep.subr.mxu0 0.0
    %1105 = vmatpush2.msra.mxu0 0.0
    %1106 = vmatprep.subr.mxu0 0.0
    %1107 = vmatpush2.msra.mxu0 0.0
    %1108 = vmatprep.subr.mxu0 0.0
    %1109 = vmatpush2.msra.mxu0 0.0
    %1110 = vmatprep.subr.mxu0 0.0
    %1111 = vmatpush2.msra.mxu0 0.0
    %1112 = vmatprep.subr.mxu0 0.0
    %1113 = vmatpush2.msra.mxu0 0.0
    %1114 = vmatprep.mubr.f32.mxu0 0.0
    %1115 = vmatmul.mubr.f32.gmra.mxu0 %v1048
    %v1116 = vpop.f32.mrf.mxu0
    %v1117 = vadd.f32 0.0, %v1116
    %v1118 = vpop.f32.mrf.mxu0
    %1119 = vdwg.mxu0
    %v1120 = vadd.f32 %v971, %v1042
    %v1122 = vrot.slane %v1117, 2
    %v1124 = vadd.f32 %v972, %v1122
    %v1126 = vrot.slane %v1124, 4
    %v1128 = vsel %vm200, %v1120, %v1126
    %v1129 = vxor.u32 %v1128, 2147483648
    %v1130 = vmul.f32 %v1129, 1.442695
    %v1131 = vpow.pop %v1130
    %v1132 = vadd.f32 %v1131, 1.0
    %v1133 = vrcp.pop %v1132
    %v1134 = vmul.f32 1.0, %v1133
    %v1135 = vtanh.pop %v1128
    %v1136 = vmul.f32 %v1134, %v958
    %1138 = vrot.lane.b32.xlu0 %v1135, 64
    %v1139 = vpop.permute.xlu0 %1138
    %v1141 = vmul.f32 %v1134, %v1139
    %1143 = vrot.lane.b32.xlu0 %v1141, 32
    %v1144 = vpop.permute.xlu0 %1143
    %v1146 = vadd.f32 %v1136, %v1144
    %v1147 = vtanh.pop %v1146
    %1149 = vrot.lane.b32.xlu0 %v1147, 64
    %v1150 = vpop.permute.xlu0 %1149
    %v1152 = vmul.f32 %v1134, %v1150
    %1154 = vrot.lane.b32.xlu0 %v1152, 32
    %v1155 = vpop.permute.xlu0 %1154
    %1157 = vst.msk [vmem:[#allocation3 + $0x8] sm:$0x3] %vm391, %v1155
    %1158 = vst.msk [vmem:[#allocation4 + $0x4] sm:$0xc] %vm393, %v1155
    %v1159 = vld [vmem:[#allocation2 + $0x10] sm:$0xc]
    %v1160 = vld [vmem:[#allocation2 + $0x8] sm:$0x30]
    %v1161 = vsel %vm95, %v1155, 0
    %1163 = vmatprep.subr.mxu0 0.0
    %1164 = vmatpush1.msra.mxu0 0.0
    %1165 = vmatprep.subr.mxu0 0.0
    %1166 = vmatpush1.msra.mxu0 0.0
    %1167 = vmatprep.subr.mxu0 0.0
    %1168 = vmatpush1.msra.mxu0 0.0
    %1169 = vmatprep.subr.mxu0 0.0
    %1170 = vmatpush1.msra.mxu0 0.0
    %1171 = vmatprep.subr.mxu0 0.0
    %1172 = vmatpush1.msra.mxu0 0.0
    %1173 = vmatprep.subr.mxu0 0.0
    %1174 = vmatpush1.msra.mxu0 0.0
    %1175 = vmatprep.subr.mxu0 0.0
    %1176 = vmatpush1.msra.mxu0 0.0
    %1177 = vmatprep.subr.mxu0 0.0
    %1178 = vmatpush1.msra.mxu0 0.0
    %1179 = vmatprep.subr.mxu0 0.0
    %1180 = vmatpush1.msra.mxu0 0.0
    %1181 = vmatprep.subr.mxu0 0.0
    %1182 = vmatpush1.msra.mxu0 0.0
    %1183 = vmatprep.subr.mxu0 0.0
    %1184 = vmatpush1.msra.mxu0 0.0
    %1185 = vmatprep.subr.mxu0 0.0
    %1186 = vmatpush1.msra.mxu0 0.0
    %1187 = vmatprep.subr.mxu0 0.0
    %1188 = vmatpush1.msra.mxu0 %v186
    %1189 = vmatprep.subr.mxu0 0.0
    %1190 = vmatpush1.msra.mxu0 %v185
    %1191 = vmatprep.subr.mxu0 0.0
    %1192 = vmatpush1.msra.mxu0 %v184
    %1193 = vmatprep.subr.mxu0 0.0
    %1194 = vmatpush1.msra.mxu0 %v183
    %1195 = vmatprep.subr.mxu0 0.0
    %1196 = vmatpush2.msra.mxu0 0.0
    %1197 = vmatprep.subr.mxu0 0.0
    %1198 = vmatpush2.msra.mxu0 0.0
    %1199 = vmatprep.subr.mxu0 0.0
    %1200 = vmatpush2.msra.mxu0 0.0
    %1201 = vmatprep.subr.mxu0 0.0
    %1202 = vmatpush2.msra.mxu0 0.0
    %1203 = vmatprep.subr.mxu0 0.0
    %1204 = vmatpush2.msra.mxu0 0.0
    %1205 = vmatprep.subr.mxu0 0.0
    %1206 = vmatpush2.msra.mxu0 0.0
    %1207 = vmatprep.subr.mxu0 0.0
    %1208 = vmatpush2.msra.mxu0 0.0
    %1209 = vmatprep.subr.mxu0 0.0
    %1210 = vmatpush2.msra.mxu0 0.0
    %1211 = vmatprep.subr.mxu0 0.0
    %1212 = vmatpush2.msra.mxu0 0.0
    %1213 = vmatprep.subr.mxu0 0.0
    %1214 = vmatpush2.msra.mxu0 0.0
    %1215 = vmatprep.subr.mxu0 0.0
    %1216 = vmatpush2.msra.mxu0 0.0
    %1217 = vmatprep.subr.mxu0 0.0
    %1218 = vmatpush2.msra.mxu0 0.0
    %1219 = vmatprep.subr.mxu0 0.0
    %1220 = vmatpush2.msra.mxu0 0.0
    %1221 = vmatprep.subr.mxu0 0.0
    %1222 = vmatpush2.msra.mxu0 0.0
    %1223 = vmatprep.subr.mxu0 0.0
    %1224 = vmatpush2.msra.mxu0 0.0
    %1225 = vmatprep.subr.mxu0 0.0
    %1226 = vmatpush2.msra.mxu0 0.0
    %1227 = vmatprep.mubr.f32.mxu0 0.0
    %1228 = vmatmul.mubr.f32.gmra.mxu0 %v1161
    %v1229 = vpop.f32.mrf.mxu0
    %v1230 = vadd.f32 0.0, %v1229
    %v1231 = vpop.f32.mrf.mxu0
    %1232 = vdwg.mxu0
    %v1233 = vrot.slane %v1152, 2
    %1234 = vrot.lane.b32.xlu0 %v1233, 32
    %v1235 = vpop.permute.xlu0 %1234
    %v1236 = vsel %vm95, %v1235, 0
    %1238 = vmatprep.subr.mxu0 0.0
    %1239 = vmatpush1.msra.mxu0 0.0
    %1240 = vmatprep.subr.mxu0 0.0
    %1241 = vmatpush1.msra.mxu0 0.0
    %1242 = vmatprep.subr.mxu0 0.0
    %1243 = vmatpush1.msra.mxu0 0.0
    %1244 = vmatprep.subr.mxu0 0.0
    %1245 = vmatpush1.msra.mxu0 0.0
    %1246 = vmatprep.subr.mxu0 0.0
    %1247 = vmatpush1.msra.mxu0 0.0
    %1248 = vmatprep.subr.mxu0 0.0
    %1249 = vmatpush1.msra.mxu0 0.0
    %1250 = vmatprep.subr.mxu0 0.0
    %1251 = vmatpush1.msra.mxu0 0.0
    %1252 = vmatprep.subr.mxu0 0.0
    %1253 = vmatpush1.msra.mxu0 0.0
    %1254 = vmatprep.subr.mxu0 0.0
    %1255 = vmatpush1.msra.mxu0 0.0
    %1256 = vmatprep.subr.mxu0 0.0
    %1257 = vmatpush1.msra.mxu0 0.0
    %1258 = vmatprep.subr.mxu0 0.0
    %1259 = vmatpush1.msra.mxu0 0.0
    %1260 = vmatprep.subr.mxu0 0.0
    %1261 = vmatpush1.msra.mxu0 0.0
    %1262 = vmatprep.subr.mxu0 0.0
    %1263 = vmatpush1.msra.mxu0 %v190
    %1264 = vmatprep.subr.mxu0 0.0
    %1265 = vmatpush1.msra.mxu0 %v189
    %1266 = vmatprep.subr.mxu0 0.0
    %1267 = vmatpush1.msra.mxu0 %v188
    %1268 = vmatprep.subr.mxu0 0.0
    %1269 = vmatpush1.msra.mxu0 %v187
    %1270 = vmatprep.subr.mxu0 0.0
    %1271 = vmatpush2.msra.mxu0 0.0
    %1272 = vmatprep.subr.mxu0 0.0
    %1273 = vmatpush2.msra.mxu0 0.0
    %1274 = vmatprep.subr.mxu0 0.0
    %1275 = vmatpush2.msra.mxu0 0.0
    %1276 = vmatprep.subr.mxu0 0.0
    %1277 = vmatpush2.msra.mxu0 0.0
    %1278 = vmatprep.subr.mxu0 0.0
    %1279 = vmatpush2.msra.mxu0 0.0
    %1280 = vmatprep.subr.mxu0 0.0
    %1281 = vmatpush2.msra.mxu0 0.0
    %1282 = vmatprep.subr.mxu0 0.0
    %1283 = vmatpush2.msra.mxu0 0.0
    %1284 = vmatprep.subr.mxu0 0.0
    %1285 = vmatpush2.msra.mxu0 0.0
    %1286 = vmatprep.subr.mxu0 0.0
    %1287 = vmatpush2.msra.mxu0 0.0
    %1288 = vmatprep.subr.mxu0 0.0
    %1289 = vmatpush2.msra.mxu0 0.0
    %1290 = vmatprep.subr.mxu0 0.0
    %1291 = vmatpush2.msra.mxu0 0.0
    %1292 = vmatprep.subr.mxu0 0.0
    %1293 = vmatpush2.msra.mxu0 0.0
    %1294 = vmatprep.subr.mxu0 0.0
    %1295 = vmatpush2.msra.mxu0 0.0
    %1296 = vmatprep.subr.mxu0 0.0
    %1297 = vmatpush2.msra.mxu0 0.0
    %1298 = vmatprep.subr.mxu0 0.0
    %1299 = vmatpush2.msra.mxu0 0.0
    %1300 = vmatprep.subr.mxu0 0.0
    %1301 = vmatpush2.msra.mxu0 0.0
    %1302 = vmatprep.mubr.f32.mxu0 0.0
    %1303 = vmatmul.mubr.f32.gmra.mxu0 %v1236
    %v1304 = vpop.f32.mrf.mxu0
    %v1305 = vadd.f32 0.0, %v1304
    %v1306 = vpop.f32.mrf.mxu0
    %1307 = vdwg.mxu0
    %v1309 = vrot.slane %v1230, 6
    %v1311 = vadd.f32 %v1159, %v1309
    %v1313 = vrot.slane %v1305, 4
    %v1315 = vadd.f32 %v1160, %v1313
    %v1317 = vrot.slane %v1311, 2
    %v1320 = vrot.slane %v1315, 2
    %v1322 = vsel %vm200, %v1317, %v1320
    %v1323 = vxor.u32 %v1322, 2147483648
    %v1324 = vmul.f32 %v1323, 1.442695
    %v1325 = vpow.pop %v1324
    %v1326 = vadd.f32 %v1325, 1.0
    %v1327 = vrcp.pop %v1326
    %v1328 = vmul.f32 1.0, %v1327
    %v1329 = vtanh.pop %v1322
    %v1330 = vmul.f32 %v1328, %v1146
    %1332 = vrot.lane.b32.xlu0 %v1329, 64
    %v1333 = vpop.permute.xlu0 %1332
    %v1335 = vmul.f32 %v1328, %v1333
    %1337 = vrot.lane.b32.xlu0 %v1335, 32
    %v1338 = vpop.permute.xlu0 %1337
    %v1340 = vadd.f32 %v1330, %v1338
    %v1341 = vtanh.pop %v1340
    %1343 = vrot.lane.b32.xlu0 %v1341, 64
    %v1344 = vpop.permute.xlu0 %1343
    %v1346 = vmul.f32 %v1328, %v1344
    %1348 = vrot.lane.b32.xlu0 %v1346, 32
    %v1349 = vpop.permute.xlu0 %1348
    %1351 = vst.msk [vmem:[#allocation3 + $0xa] sm:$0x3] %vm391, %v1349
    %1352 = vst.msk [vmem:[#allocation4 + $0x2] sm:$0xc] %vm393, %v1349
    %v1353 = vld [vmem:[#allocation2 + $0x10] sm:$0x30]
    %v1354 = vld [vmem:[#allocation2 + $0x8] sm:$0xc]
    %v1355 = vsel %vm95, %v1349, 0
    %1357 = vmatprep.subr.mxu0 0.0
    %1358 = vmatpush1.msra.mxu0 0.0
    %1359 = vmatprep.subr.mxu0 0.0
    %1360 = vmatpush1.msra.mxu0 0.0
    %1361 = vmatprep.subr.mxu0 0.0
    %1362 = vmatpush1.msra.mxu0 0.0
    %1363 = vmatprep.subr.mxu0 0.0
    %1364 = vmatpush1.msra.mxu0 0.0
    %1365 = vmatprep.subr.mxu0 0.0
    %1366 = vmatpush1.msra.mxu0 0.0
    %1367 = vmatprep.subr.mxu0 0.0
    %1368 = vmatpush1.msra.mxu0 0.0
    %1369 = vmatprep.subr.mxu0 0.0
    %1370 = vmatpush1.msra.mxu0 0.0
    %1371 = vmatprep.subr.mxu0 0.0
    %1372 = vmatpush1.msra.mxu0 0.0
    %1373 = vmatprep.subr.mxu0 0.0
    %1374 = vmatpush1.msra.mxu0 0.0
    %1375 = vmatprep.subr.mxu0 0.0
    %1376 = vmatpush1.msra.mxu0 0.0
    %1377 = vmatprep.subr.mxu0 0.0
    %1378 = vmatpush1.msra.mxu0 0.0
    %1379 = vmatprep.subr.mxu0 0.0
    %1380 = vmatpush1.msra.mxu0 0.0
    %1381 = vmatprep.subr.mxu0 0.0
    %1382 = vmatpush1.msra.mxu0 %v186
    %1383 = vmatprep.subr.mxu0 0.0
    %1384 = vmatpush1.msra.mxu0 %v185
    %1385 = vmatprep.subr.mxu0 0.0
    %1386 = vmatpush1.msra.mxu0 %v184
    %1387 = vmatprep.subr.mxu0 0.0
    %1388 = vmatpush1.msra.mxu0 %v183
    %1389 = vmatprep.subr.mxu0 0.0
    %1390 = vmatpush2.msra.mxu0 0.0
    %1391 = vmatprep.subr.mxu0 0.0
    %1392 = vmatpush2.msra.mxu0 0.0
    %1393 = vmatprep.subr.mxu0 0.0
    %1394 = vmatpush2.msra.mxu0 0.0
    %1395 = vmatprep.subr.mxu0 0.0
    %1396 = vmatpush2.msra.mxu0 0.0
    %1397 = vmatprep.subr.mxu0 0.0
    %1398 = vmatpush2.msra.mxu0 0.0
    %1399 = vmatprep.subr.mxu0 0.0
    %1400 = vmatpush2.msra.mxu0 0.0
    %1401 = vmatprep.subr.mxu0 0.0
    %1402 = vmatpush2.msra.mxu0 0.0
    %1403 = vmatprep.subr.mxu0 0.0
    %1404 = vmatpush2.msra.mxu0 0.0
    %1405 = vmatprep.subr.mxu0 0.0
    %1406 = vmatpush2.msra.mxu0 0.0
    %1407 = vmatprep.subr.mxu0 0.0
    %1408 = vmatpush2.msra.mxu0 0.0
    %1409 = vmatprep.subr.mxu0 0.0
    %1410 = vmatpush2.msra.mxu0 0.0
    %1411 = vmatprep.subr.mxu0 0.0
    %1412 = vmatpush2.msra.mxu0 0.0
    %1413 = vmatprep.subr.mxu0 0.0
    %1414 = vmatpush2.msra.mxu0 0.0
    %1415 = vmatprep.subr.mxu0 0.0
    %1416 = vmatpush2.msra.mxu0 0.0
    %1417 = vmatprep.subr.mxu0 0.0
    %1418 = vmatpush2.msra.mxu0 0.0
    %1419 = vmatprep.subr.mxu0 0.0
    %1420 = vmatpush2.msra.mxu0 0.0
    %1421 = vmatprep.mubr.f32.mxu0 0.0
    %1422 = vmatmul.mubr.f32.gmra.mxu0 %v1355
    %v1423 = vpop.f32.mrf.mxu0
    %v1424 = vadd.f32 0.0, %v1423
    %v1425 = vpop.f32.mrf.mxu0
    %1426 = vdwg.mxu0
    %v1427 = vrot.slane %v1346, 2
    %1428 = vrot.lane.b32.xlu0 %v1427, 32
    %v1429 = vpop.permute.xlu0 %1428
    %v1430 = vsel %vm95, %v1429, 0
    %1432 = vmatprep.subr.mxu0 0.0
    %1433 = vmatpush1.msra.mxu0 0.0
    %1434 = vmatprep.subr.mxu0 0.0
    %1435 = vmatpush1.msra.mxu0 0.0
    %1436 = vmatprep.subr.mxu0 0.0
    %1437 = vmatpush1.msra.mxu0 0.0
    %1438 = vmatprep.subr.mxu0 0.0
    %1439 = vmatpush1.msra.mxu0 0.0
    %1440 = vmatprep.subr.mxu0 0.0
    %1441 = vmatpush1.msra.mxu0 0.0
    %1442 = vmatprep.subr.mxu0 0.0
    %1443 = vmatpush1.msra.mxu0 0.0
    %1444 = vmatprep.subr.mxu0 0.0
    %1445 = vmatpush1.msra.mxu0 0.0
    %1446 = vmatprep.subr.mxu0 0.0
    %1447 = vmatpush1.msra.mxu0 0.0
    %1448 = vmatprep.subr.mxu0 0.0
    %1449 = vmatpush1.msra.mxu0 0.0
    %1450 = vmatprep.subr.mxu0 0.0
    %1451 = vmatpush1.msra.mxu0 0.0
    %1452 = vmatprep.subr.mxu0 0.0
    %1453 = vmatpush1.msra.mxu0 0.0
    %1454 = vmatprep.subr.mxu0 0.0
    %1455 = vmatpush1.msra.mxu0 0.0
    %1456 = vmatprep.subr.mxu0 0.0
    %1457 = vmatpush1.msra.mxu0 %v190
    %1458 = vmatprep.subr.mxu0 0.0
    %1459 = vmatpush1.msra.mxu0 %v189
    %1460 = vmatprep.subr.mxu0 0.0
    %1461 = vmatpush1.msra.mxu0 %v188
    %1462 = vmatprep.subr.mxu0 0.0
    %1463 = vmatpush1.msra.mxu0 %v187
    %1464 = vmatprep.subr.mxu0 0.0
    %1465 = vmatpush2.msra.mxu0 0.0
    %1466 = vmatprep.subr.mxu0 0.0
    %1467 = vmatpush2.msra.mxu0 0.0
    %1468 = vmatprep.subr.mxu0 0.0
    %1469 = vmatpush2.msra.mxu0 0.0
    %1470 = vmatprep.subr.mxu0 0.0
    %1471 = vmatpush2.msra.mxu0 0.0
    %1472 = vmatprep.subr.mxu0 0.0
    %1473 = vmatpush2.msra.mxu0 0.0
    %1474 = vmatprep.subr.mxu0 0.0
    %1475 = vmatpush2.msra.mxu0 0.0
    %1476 = vmatprep.subr.mxu0 0.0
    %1477 = vmatpush2.msra.mxu0 0.0
    %1478 = vmatprep.subr.mxu0 0.0
    %1479 = vmatpush2.msra.mxu0 0.0
    %1480 = vmatprep.subr.mxu0 0.0
    %1481 = vmatpush2.msra.mxu0 0.0
    %1482 = vmatprep.subr.mxu0 0.0
    %1483 = vmatpush2.msra.mxu0 0.0
    %1484 = vmatprep.subr.mxu0 0.0
    %1485 = vmatpush2.msra.mxu0 0.0
    %1486 = vmatprep.subr.mxu0 0.0
    %1487 = vmatpush2.msra.mxu0 0.0
    %1488 = vmatprep.subr.mxu0 0.0
    %1489 = vmatpush2.msra.mxu0 0.0
    %1490 = vmatprep.subr.mxu0 0.0
    %1491 = vmatpush2.msra.mxu0 0.0
    %1492 = vmatprep.subr.mxu0 0.0
    %1493 = vmatpush2.msra.mxu0 0.0
    %1494 = vmatprep.subr.mxu0 0.0
    %1495 = vmatpush2.msra.mxu0 0.0
    %1496 = vmatprep.mubr.f32.mxu0 0.0
    %1497 = vmatmul.mubr.f32.gmra.mxu0 %v1430
    %v1498 = vpop.f32.mrf.mxu0
    %v1499 = vadd.f32 0.0, %v1498
    %v1500 = vpop.f32.mrf.mxu0
    %1501 = vdwg.mxu0
    %v1503 = vrot.slane %v1424, 4
    %v1505 = vadd.f32 %v1353, %v1503
    %v1507 = vrot.slane %v1499, 6
    %v1509 = vadd.f32 %v1354, %v1507
    %v1511 = vrot.slane %v1505, 4
    %v1513 = vsel %vm200, %v1511, %v1509
    %v1514 = vxor.u32 %v1513, 2147483648
    %v1515 = vmul.f32 %v1514, 1.442695
    %v1516 = vpow.pop %v1515
    %v1517 = vadd.f32 %v1516, 1.0
    %v1518 = vrcp.pop %v1517
    %v1519 = vmul.f32 1.0, %v1518
    %v1520 = vtanh.pop %v1513
    %v1521 = vmul.f32 %v1519, %v1340
    %1523 = vrot.lane.b32.xlu0 %v1520, 64
    %v1524 = vpop.permute.xlu0 %1523
    %v1526 = vmul.f32 %v1519, %v1524
    %1528 = vrot.lane.b32.xlu0 %v1526, 32
    %v1529 = vpop.permute.xlu0 %1528
    %v1531 = vadd.f32 %v1521, %v1529
    %v1532 = vtanh.pop %v1531
    %1534 = vrot.lane.b32.xlu0 %v1532, 64
    %v1535 = vpop.permute.xlu0 %1534
    %v1537 = vmul.f32 %v1519, %v1535
    %1539 = vrot.lane.b32.xlu0 %v1537, 32
    %v1540 = vpop.permute.xlu0 %1539
    %1542 = vst.msk [vmem:[#allocation3 + $0xc] sm:$0x3] %vm391, %v1540
    %1543 = vst.msk [vmem:[#allocation4] sm:$0xc] %vm393, %v1540
    %v1544 = vld [vmem:[#allocation2 + $0x10] sm:$0xc0]
    %v1545 = vld [vmem:[#allocation2 + $0x8] sm:$0x3]
    %v1546 = vsel %vm95, %v1540, 0
    %1548 = vmatprep.subr.mxu0 0.0
    %1549 = vmatpush1.msra.mxu0 0.0
    %1550 = vmatprep.subr.mxu0 0.0
    %1551 = vmatpush1.msra.mxu0 0.0
    %1552 = vmatprep.subr.mxu0 0.0
    %1553 = vmatpush1.msra.mxu0 0.0
    %1554 = vmatprep.subr.mxu0 0.0
    %1555 = vmatpush1.msra.mxu0 0.0
    %1556 = vmatprep.subr.mxu0 0.0
    %1557 = vmatpush1.msra.mxu0 0.0
    %1558 = vmatprep.subr.mxu0 0.0
    %1559 = vmatpush1.msra.mxu0 0.0
    %1560 = vmatprep.subr.mxu0 0.0
    %1561 = vmatpush1.msra.mxu0 0.0
    %1562 = vmatprep.subr.mxu0 0.0
    %1563 = vmatpush1.msra.mxu0 0.0
    %1564 = vmatprep.subr.mxu0 0.0
    %1565 = vmatpush1.msra.mxu0 0.0
    %1566 = vmatprep.subr.mxu0 0.0
    %1567 = vmatpush1.msra.mxu0 0.0
    %1568 = vmatprep.subr.mxu0 0.0
    %1569 = vmatpush1.msra.mxu0 0.0
    %1570 = vmatprep.subr.mxu0 0.0
    %1571 = vmatpush1.msra.mxu0 0.0
    %1572 = vmatprep.subr.mxu0 0.0
    %1573 = vmatpush1.msra.mxu0 %v186
    %1574 = vmatprep.subr.mxu0 0.0
    %1575 = vmatpush1.msra.mxu0 %v185
    %1576 = vmatprep.subr.mxu0 0.0
    %1577 = vmatpush1.msra.mxu0 %v184
    %1578 = vmatprep.subr.mxu0 0.0
    %1579 = vmatpush1.msra.mxu0 %v183
    %1580 = vmatprep.subr.mxu0 0.0
    %1581 = vmatpush2.msra.mxu0 0.0
    %1582 = vmatprep.subr.mxu0 0.0
    %1583 = vmatpush2.msra.mxu0 0.0
    %1584 = vmatprep.subr.mxu0 0.0
    %1585 = vmatpush2.msra.mxu0 0.0
    %1586 = vmatprep.subr.mxu0 0.0
    %1587 = vmatpush2.msra.mxu0 0.0
    %1588 = vmatprep.subr.mxu0 0.0
    %1589 = vmatpush2.msra.mxu0 0.0
    %1590 = vmatprep.subr.mxu0 0.0
    %1591 = vmatpush2.msra.mxu0 0.0
    %1592 = vmatprep.subr.mxu0 0.0
    %1593 = vmatpush2.msra.mxu0 0.0
    %1594 = vmatprep.subr.mxu0 0.0
    %1595 = vmatpush2.msra.mxu0 0.0
    %1596 = vmatprep.subr.mxu0 0.0
    %1597 = vmatpush2.msra.mxu0 0.0
    %1598 = vmatprep.subr.mxu0 0.0
    %1599 = vmatpush2.msra.mxu0 0.0
    %1600 = vmatprep.subr.mxu0 0.0
    %1601 = vmatpush2.msra.mxu0 0.0
    %1602 = vmatprep.subr.mxu0 0.0
    %1603 = vmatpush2.msra.mxu0 0.0
    %1604 = vmatprep.subr.mxu0 0.0
    %1605 = vmatpush2.msra.mxu0 0.0
    %1606 = vmatprep.subr.mxu0 0.0
    %1607 = vmatpush2.msra.mxu0 0.0
    %1608 = vmatprep.subr.mxu0 0.0
    %1609 = vmatpush2.msra.mxu0 0.0
    %1610 = vmatprep.subr.mxu0 0.0
    %1611 = vmatpush2.msra.mxu0 0.0
    %1612 = vmatprep.mubr.f32.mxu0 0.0
    %1613 = vmatmul.mubr.f32.gmra.mxu0 %v1546
    %v1614 = vpop.f32.mrf.mxu0
    %v1615 = vadd.f32 0.0, %v1614
    %v1616 = vpop.f32.mrf.mxu0
    %1617 = vdwg.mxu0
    %v1618 = vrot.slane %v1537, 2
    %1619 = vrot.lane.b32.xlu0 %v1618, 32
    %v1620 = vpop.permute.xlu0 %1619
    %v1621 = vsel %vm95, %v1620, 0
    %1623 = vmatprep.subr.mxu0 0.0
    %1624 = vmatpush1.msra.mxu0 0.0
    %1625 = vmatprep.subr.mxu0 0.0
    %1626 = vmatpush1.msra.mxu0 0.0
    %1627 = vmatprep.subr.mxu0 0.0
    %1628 = vmatpush1.msra.mxu0 0.0
    %1629 = vmatprep.subr.mxu0 0.0
    %1630 = vmatpush1.msra.mxu0 0.0
    %1631 = vmatprep.subr.mxu0 0.0
    %1632 = vmatpush1.msra.mxu0 0.0
    %1633 = vmatprep.subr.mxu0 0.0
    %1634 = vmatpush1.msra.mxu0 0.0
    %1635 = vmatprep.subr.mxu0 0.0
    %1636 = vmatpush1.msra.mxu0 0.0
    %1637 = vmatprep.subr.mxu0 0.0
    %1638 = vmatpush1.msra.mxu0 0.0
    %1639 = vmatprep.subr.mxu0 0.0
    %1640 = vmatpush1.msra.mxu0 0.0
    %1641 = vmatprep.subr.mxu0 0.0
    %1642 = vmatpush1.msra.mxu0 0.0
    %1643 = vmatprep.subr.mxu0 0.0
    %1644 = vmatpush1.msra.mxu0 0.0
    %1645 = vmatprep.subr.mxu0 0.0
    %1646 = vmatpush1.msra.mxu0 0.0
    %1647 = vmatprep.subr.mxu0 0.0
    %1648 = vmatpush1.msra.mxu0 %v190
    %1649 = vmatprep.subr.mxu0 0.0
    %1650 = vmatpush1.msra.mxu0 %v189
    %1651 = vmatprep.subr.mxu0 0.0
    %1652 = vmatpush1.msra.mxu0 %v188
    %1653 = vmatprep.subr.mxu0 0.0
    %1654 = vmatpush1.msra.mxu0 %v187
    %1655 = vmatprep.subr.mxu0 0.0
    %1656 = vmatpush2.msra.mxu0 0.0
    %1657 = vmatprep.subr.mxu0 0.0
    %1658 = vmatpush2.msra.mxu0 0.0
    %1659 = vmatprep.subr.mxu0 0.0
    %1660 = vmatpush2.msra.mxu0 0.0
    %1661 = vmatprep.subr.mxu0 0.0
    %1662 = vmatpush2.msra.mxu0 0.0
    %1663 = vmatprep.subr.mxu0 0.0
    %1664 = vmatpush2.msra.mxu0 0.0
    %1665 = vmatprep.subr.mxu0 0.0
    %1666 = vmatpush2.msra.mxu0 0.0
    %1667 = vmatprep.subr.mxu0 0.0
    %1668 = vmatpush2.msra.mxu0 0.0
    %1669 = vmatprep.subr.mxu0 0.0
    %1670 = vmatpush2.msra.mxu0 0.0
    %1671 = vmatprep.subr.mxu0 0.0
    %1672 = vmatpush2.msra.mxu0 0.0
    %1673 = vmatprep.subr.mxu0 0.0
    %1674 = vmatpush2.msra.mxu0 0.0
    %1675 = vmatprep.subr.mxu0 0.0
    %1676 = vmatpush2.msra.mxu0 0.0
    %1677 = vmatprep.subr.mxu0 0.0
    %1678 = vmatpush2.msra.mxu0 0.0
    %1679 = vmatprep.subr.mxu0 0.0
    %1680 = vmatpush2.msra.mxu0 0.0
    %1681 = vmatprep.subr.mxu0 0.0
    %1682 = vmatpush2.msra.mxu0 0.0
    %1683 = vmatprep.subr.mxu0 0.0
    %1684 = vmatpush2.msra.mxu0 0.0
    %1685 = vmatprep.subr.mxu0 0.0
    %1686 = vmatpush2.msra.mxu0 0.0
    %1687 = vmatprep.mubr.f32.mxu0 0.0
    %1688 = vmatmul.mubr.f32.gmra.mxu0 %v1621
    %v1689 = vpop.f32.mrf.mxu0
    %v1690 = vadd.f32 0.0, %v1689
    %v1691 = vpop.f32.mrf.mxu0
    %1692 = vdwg.mxu0
    %v1694 = vrot.slane %v1615, 2
    %v1696 = vadd.f32 %v1544, %v1694
    %v1697 = vadd.f32 %v1545, %v1690
    %v1699 = vrot.slane %v1696, 6
    %v1702 = vrot.slane %v1697, 6
    %v1704 = vsel %vm200, %v1699, %v1702
    %v1705 = vxor.u32 %v1704, 2147483648
    %v1706 = vmul.f32 %v1705, 1.442695
    %v1707 = vpow.pop %v1706
    %v1708 = vadd.f32 %v1707, 1.0
    %v1709 = vrcp.pop %v1708
    %v1710 = vmul.f32 1.0, %v1709
    %v1711 = vtanh.pop %v1704
    %v1712 = vmul.f32 %v1710, %v1531
    %1714 = vrot.lane.b32.xlu0 %v1711, 64
    %v1715 = vpop.permute.xlu0 %1714
    %v1717 = vmul.f32 %v1710, %v1715
    %1719 = vrot.lane.b32.xlu0 %v1717, 32
    %v1720 = vpop.permute.xlu0 %1719
    %v1722 = vadd.f32 %v1712, %v1720
    %v1723 = vtanh.pop %v1722
    %1725 = vrot.lane.b32.xlu0 %v1723, 64
    %v1726 = vpop.permute.xlu0 %1725
    %v1728 = vmul.f32 %v1710, %v1726
    %1730 = vrot.lane.b32.xlu0 %v1728, 32
    %v1731 = vpop.permute.xlu0 %1730
    %1733 = vst.msk [vmem:[#allocation3 + $0xe] sm:$0x3] %vm391, %v1731
    %1734 = vst.msk [vmem:[#allocation4 - $0x2] sm:$0xc] %vm393, %v1731
    %v1735 = vld [vmem:[#allocation3] sm:$0xff]
    %v1736 = vld [vmem:[#allocation3 + $0x8] sm:$0xff]
    %v1737 = vld [vmem:[#allocation4] sm:$0xff]
    %v1738 = vld [vmem:[#allocation4 + $0x8] sm:$0xff]
    %v1739 = vadd.f32 %v1735, %v1737
    %v1740 = vadd.f32 %v1736, %v1738
    %v1741 = vmul.f32 %v1739, 0.5
    %v1742 = vmul.f32 %v1740, 0.5
    %v1743 = vld [vmem:[%s7] sm:$0xff]
    %v1744 = vld [vmem:[%s7 + $0x8] sm:$0xff]
    %v1745 = vld [vmem:[%s7 + $0x10] sm:$0xff]
    %v1746 = vld [vmem:[%s7 + $0x18] sm:$0xff]
    %v1747 = vld [vmem:[%s8] sm:$0x1]
    %v1749 = vlaneseq
    %v1750 = vshrl.u32 %v1749, 7
    %v1751 = vsub.s32 0, %v1750
    %v1752 = vrot.slane %v1747, %v1751
    %v1755 = vsel %vm95, %v1741, 0
    %v1758 = vsel %vm95, %v1742, 0
    %1760 = vmatprep.subr.mxu0 0.0
    %1761 = vmatpush1.msra.mxu0 0.0
    %1762 = vmatprep.subr.mxu0 0.0
    %1763 = vmatpush1.msra.mxu0 0.0
    %1764 = vmatprep.subr.mxu0 0.0
    %1765 = vmatpush1.msra.mxu0 0.0
    %1766 = vmatprep.subr.mxu0 0.0
    %1767 = vmatpush1.msra.mxu0 0.0
    %1768 = vmatprep.subr.mxu0 0.0
    %1769 = vmatpush1.msra.mxu0 0.0
    %1770 = vmatprep.subr.mxu0 0.0
    %1771 = vmatpush1.msra.mxu0 0.0
    %1772 = vmatprep.subr.mxu0 0.0
    %1773 = vmatpush1.msra.mxu0 0.0
    %1774 = vmatprep.subr.mxu0 0.0
    %1775 = vmatpush1.msra.mxu0 0.0
    %1776 = vmatprep.subr.mxu0 0.0
    %1777 = vmatpush1.msra.mxu0 0.0
    %1778 = vmatprep.subr.mxu0 0.0
    %1779 = vmatpush1.msra.mxu0 0.0
    %1780 = vmatprep.subr.mxu0 0.0
    %1781 = vmatpush1.msra.mxu0 0.0
    %1782 = vmatprep.subr.mxu0 0.0
    %1783 = vmatpush1.msra.mxu0 0.0
    %1784 = vmatprep.subr.mxu0 0.0
    %1785 = vmatpush1.msra.mxu0 %v1746
    %1786 = vmatprep.subr.mxu0 0.0
    %1787 = vmatpush1.msra.mxu0 %v1745
    %1788 = vmatprep.subr.mxu0 0.0
    %1789 = vmatpush1.msra.mxu0 %v1744
    %1790 = vmatprep.subr.mxu0 0.0
    %1791 = vmatpush1.msra.mxu0 %v1743
    %1792 = vmatprep.subr.mxu0 0.0
    %1793 = vmatpush2.msra.mxu0 0.0
    %1794 = vmatprep.subr.mxu0 0.0
    %1795 = vmatpush2.msra.mxu0 0.0
    %1796 = vmatprep.subr.mxu0 0.0
    %1797 = vmatpush2.msra.mxu0 0.0
    %1798 = vmatprep.subr.mxu0 0.0
    %1799 = vmatpush2.msra.mxu0 0.0
    %1800 = vmatprep.subr.mxu0 0.0
    %1801 = vmatpush2.msra.mxu0 0.0
    %1802 = vmatprep.subr.mxu0 0.0
    %1803 = vmatpush2.msra.mxu0 0.0
    %1804 = vmatprep.subr.mxu0 0.0
    %1805 = vmatpush2.msra.mxu0 0.0
    %1806 = vmatprep.subr.mxu0 0.0
    %1807 = vmatpush2.msra.mxu0 0.0
    %1808 = vmatprep.subr.mxu0 0.0
    %1809 = vmatpush2.msra.mxu0 0.0
    %1810 = vmatprep.subr.mxu0 0.0
    %1811 = vmatpush2.msra.mxu0 0.0
    %1812 = vmatprep.subr.mxu0 0.0
    %1813 = vmatpush2.msra.mxu0 0.0
    %1814 = vmatprep.subr.mxu0 0.0
    %1815 = vmatpush2.msra.mxu0 0.0
    %1816 = vmatprep.subr.mxu0 0.0
    %1817 = vmatpush2.msra.mxu0 0.0
    %1818 = vmatprep.subr.mxu0 0.0
    %1819 = vmatpush2.msra.mxu0 0.0
    %1820 = vmatprep.subr.mxu0 0.0
    %1821 = vmatpush2.msra.mxu0 0.0
    %1822 = vmatprep.subr.mxu0 0.0
    %1823 = vmatpush2.msra.mxu0 0.0
    %1824 = vmatprep.mubr.f32.mxu0 0.0
    %1825 = vmatmul.mubr.f32.gmra.mxu0 %v1755
    %v1826 = vpop.f32.mrf.mxu0
    %v1827 = vadd.f32 %v1752, %v1826
    %v1828 = vpop.f32.mrf.mxu0
    %1829 = vmatprep.mubr.f32.mxu0 0.0
    %1830 = vmatmul.mubr.f32.gmra.mxu0 %v1758
    %v1831 = vpop.f32.mrf.mxu0
    %v1832 = vadd.f32 %v1752, %v1831
    %v1833 = vpop.f32.mrf.mxu0
    %1834 = vdwg.mxu0
    %vm1835 = vcmask 64512
    %v1836 = vsel %vm1835, %v1827, -inf
    %1837 = vmax.xlane.f32.xlu0 %v1836
    %v1838 = vpop.xlane.xlu0 %1837
    %v1839 = vsel %vm1835, %v1832, -inf
    %1840 = vmax.xlane.f32.xlu0 %v1839
    %v1841 = vpop.xlane.xlu0 %1840
    %v1842 = vsub.f32 %v1827, %v1838
    %v1843 = vsub.f32 %v1832, %v1841
    %v1844 = vmul.f32 %v1842, 1.442695
    %v1845 = vpow.pop %v1844
    %v1846 = vmul.f32 %v1843, 1.442695
    %v1847 = vpow.pop %v1846
    %v1848 = vsel %vm1835, %v1845, 0.0
    %1849 = vadd.xlane.f32.xlu0 %v1848
    %v1850 = vpop.xlane.xlu0 %1849
    %v1851 = vsel %vm1835, %v1847, 0.0
    %1852 = vadd.xlane.f32.xlu0 %v1851
    %v1853 = vpop.xlane.xlu0 %1852
    %v1854 = vlog2.pop %v1850
    %v1855 = vmul.f32 %v1854, 0.6931472
    %v1856 = vlog2.pop %v1853
    %v1857 = vmul.f32 %v1856, 0.6931472
    %v1858 = vsub.f32 %v1842, %v1855
    %v1859 = vsub.f32 %v1843, %v1857
    %1860 = vst.msk [vmem:[%s9] sm:$0xff] %vm1835, %v1858
    %1861 = vst.msk [vmem:[%s9 + $0x8] sm:$0xff] %vm1835, %v1859
    // Predicated region
    $region50: #{tpu_custom_call.1} parent=1 // pred_check
      _
    $region51: #{tpu_custom_call.1} parent=1 // pred_check_branch
      %1863 = sbr.rel (0) target = $region53
    $region52: #{tpu_custom_call.1} parent=1 // pred_region
      _
    $region53: #{tpu_custom_call.1} parent=1 // pred_fallthru
      _
    // Predicated region
    $region54: #{tpu_custom_call.1} parent=1 // pred_check
      _
    $region55: #{tpu_custom_call.1} parent=1 // pred_check_branch
      %1865 = sbr.rel (0) target = $region57
    $region56: #{tpu_custom_call.1} parent=1 // pred_region
      _
    $region57: #{tpu_custom_call.1} parent=1 // pred_fallthru
      _
    %1866 = vsyncpa [#allocation6], 1
    %1867 = vsyncpa [#allocation8], 1

</llo_original>
